<compile_context>
chip_gen: v6e
topology: v6e:2x2x1
jax: 0.10.0
libtpu: 0.0.40
codegen_flags: <defaults>
</compile_context>

<pallas_src>
from functools import partial

import jax
import jax.numpy as jnp
from jax.experimental import pallas as pl
from jax.experimental.pallas import tpu as pltpu

C_IN = 56
C_OUT = 1344
H = 14
W = 14
HW = H * W

NUM_TILES = 2                  # 2 = megacore split on v7x + double-buffering; more
TILE_C = C_OUT // NUM_TILES    # tiles only add per-step overhead on this tiny kernel


def se_gate_mul_kernel(w_ref, x_ref, b_ref, a_ref, o_ref):
    # w_ref: (TILE_C, C_IN), x_ref: (C_IN, 1), b_ref: (TILE_C, 1),
    # a_ref/o_ref: (TILE_C, HW)  (o aliases a in HBM: gate applied in place)
    # 1x1 conv on a 1x1 spatial input == matvec on the MXU, accumulate in f32.
    logits = jnp.dot(w_ref[...], x_ref[...],
                     preferred_element_type=jnp.float32)       # (TILE_C, 1)
    gate = jax.nn.sigmoid(logits + b_ref[...])                 # (TILE_C, 1), EUP
    # Broadcast the per-channel gate over the flattened-spatial lane axis and scale.
    o_ref[...] = (gate * a_ref[...]).astype(o_ref.dtype)       # (TILE_C, HW)


@partial(jax.jit, donate_argnums=(3,))
def se_gate_mul(weight, bias, x490, x487):
    """weight: (C_OUT, C_IN, 1, 1), bias: (C_OUT,),
    x490: (1, C_IN, 1, 1), x487: (1, C_OUT, H, W) -> (1, C_OUT, H, W).

    x487 is donated and gated in place via input_output_aliases."""
    w2d = weight.reshape(C_OUT, C_IN)     # bitcast reshapes (row-major contiguous)
    x2d = x490.reshape(C_IN, 1)
    b2d = bias.reshape(C_OUT, 1)
    a2d = x487.reshape(C_OUT, HW)

    cost = pl.CostEstimate(
        flops=2 * C_OUT * C_IN + C_OUT + C_OUT * HW,
        transcendentals=C_OUT,
        bytes_accessed=4 * (C_OUT * C_IN + C_IN + C_OUT + 2 * C_OUT * HW),
    )

    out = pl.pallas_call(
        se_gate_mul_kernel,
        out_shape=jax.ShapeDtypeStruct((C_OUT, HW), x487.dtype),
        grid=(NUM_TILES,),
        in_specs=[
            pl.BlockSpec((TILE_C, C_IN), lambda i: (i, 0)),    # weight tile
            pl.BlockSpec((C_IN, 1), lambda i: (0, 0)),         # squeeze vector (shared)
            pl.BlockSpec((TILE_C, 1), lambda i: (i, 0)),       # bias tile
            pl.BlockSpec((TILE_C, HW), lambda i: (i, 0)),      # feature-map tile
        ],
        out_specs=pl.BlockSpec((TILE_C, HW), lambda i: (i, 0)),
        input_output_aliases={3: 0},                           # gate x487 in place
        compiler_params=pltpu.CompilerParams(
            dimension_semantics=("parallel",)),                # megacore-shardable
        cost_estimate=cost,
    )(w2d, x2d, b2d, a2d)

    return out.reshape(1, C_OUT, H, W)


def _reference(weight, bias, x490, x487):
    # Plain-JAX reference for correctness checking.
    w2d = weight.reshape(C_OUT, C_IN)
    x = x490.reshape(C_IN)
    gate = jax.nn.sigmoid(w2d @ x + bias)                      # (C_OUT,)
    return gate.reshape(1, C_OUT, 1, 1) * x487


if __name__ == "__main__":
    key = jax.random.PRNGKey(0)
    k_w, k_b, k_x490, k_x487 = jax.random.split(key, 4)

    # Deterministic parameters (Conv2d(56, 1344, 1) -> weight (1344,56,1,1), bias (1344,))
    weight = (jax.random.normal(k_w, (C_OUT, C_IN, 1, 1), dtype=jnp.float32)
              * (1.0 / jnp.sqrt(C_IN)))
    bias = jax.random.normal(k_b, (C_OUT,), dtype=jnp.float32) * 0.01

    # Inputs matching the module's forward signature shapes.
    x490 = jax.random.normal(k_x490, (1, C_IN, 1, 1), dtype=jnp.float32)
    x487 = jax.random.normal(k_x487, (1, C_OUT, H, W), dtype=jnp.float32)

    # Reference must be computed BEFORE the kernel call: x487 is donated to it.
    ref = jax.block_until_ready(_reference(weight, bias, x490, x487))

    out = jax.block_until_ready(se_gate_mul(weight, bias, x490, x487))

    assert out.shape == (1, C_OUT, H, W)
    assert out.dtype == ref.dtype
    assert jnp.allclose(out, ref, atol=1e-5, rtol=1e-5)
    print("KERNEL_OK")
</pallas_src>

<mosaic_0001>
module attributes {stable_mosaic.version = 11 : i64} {
  func.func @se_gate_mul_kernel(%arg0: i32, %arg1: memref<672x56xf32, #tpu.memory_space<vmem>>, %arg2: memref<56x1xf32, #tpu.memory_space<vmem>>, %arg3: memref<672x1xf32, #tpu.memory_space<vmem>>, %arg4: memref<672x196xf32, #tpu.memory_space<vmem>>, %arg5: memref<672x196xf32, #tpu.memory_space<vmem>>) attributes {dimension_semantics = [#tpu.dimension_semantics<parallel>], iteration_bounds = array<i64: 2>, scalar_prefetch = 0 : i64, scratch_operands = 0 : i64, tpu.core_type = #tpu.core_type<tc>, window_params = [{transform_indices = @transform_0, window_bounds = array<i64: 672, 56>}, {pipeline_mode = #tpu.pipeline_mode<synchronous>, transform_indices = @transform_1, window_bounds = array<i64: 56, 1>}, {transform_indices = @transform_2, window_bounds = array<i64: 672, 1>}, {transform_indices = @transform_3, window_bounds = array<i64: 672, 196>}, {transform_indices = @transform_4, window_bounds = array<i64: 672, 196>}]} {
    %c0 = arith.constant 0 : index
    %c0_0 = arith.constant 0 : index
    %0 = vector.load %arg1[%c0, %c0_0] : memref<672x56xf32, #tpu.memory_space<vmem>>, vector<672x56xf32>
    %c0_1 = arith.constant 0 : index
    %c0_2 = arith.constant 0 : index
    %1 = vector.load %arg2[%c0_1, %c0_2] : memref<56x1xf32, #tpu.memory_space<vmem>>, vector<56x1xf32>
    %cst = arith.constant dense<0.000000e+00> : vector<672x1xf32>
    %2 = tpu.matmul %0, %1, %cst {dimension_numbers = #tpu.dot_dimension_numbers<[1], [0], [0], [1], [0, 0, 1, 1], [], []>} : vector<672x56xf32>, vector<56x1xf32>, vector<672x1xf32> -> vector<672x1xf32>
    %c0_3 = arith.constant 0 : index
    %c0_4 = arith.constant 0 : index
    %3 = vector.load %arg3[%c0_3, %c0_4] : memref<672x1xf32, #tpu.memory_space<vmem>>, vector<672x1xf32>
    %4 = arith.addf %2, %3 : vector<672x1xf32>
    %5 = arith.negf %4 : vector<672x1xf32>
    %6 = math.exp %5 : vector<672x1xf32>
    %cst_5 = arith.constant 1.000000e+00 : f32
    %7 = vector.broadcast %cst_5 : f32 to vector<672x1xf32>
    %8 = arith.addf %7, %6 : vector<672x1xf32>
    %9 = arith.divf %7, %8 : vector<672x1xf32>
    %c0_6 = arith.constant 0 : index
    %c0_7 = arith.constant 0 : index
    %10 = vector.load %arg4[%c0_6, %c0_7] : memref<672x196xf32, #tpu.memory_space<vmem>>, vector<672x196xf32>
    %11 = vector.broadcast %9 : vector<672x1xf32> to vector<672x196xf32>
    %12 = arith.mulf %11, %10 : vector<672x196xf32>
    %c0_8 = arith.constant 0 : index
    %c0_9 = arith.constant 0 : index
    %13 = vector.load %arg5[%c0_8, %c0_9] : memref<672x196xf32, #tpu.memory_space<vmem>>, vector<672x196xf32>
    tpu.vector_store %arg5[%c0_8, %c0_9], %12 {strides = array<i32>} : memref<672x196xf32, #tpu.memory_space<vmem>>, vector<672x196xf32>,
    return
  }
  func.func @transform_0(%arg0: i32) -> (i32, i32) {
    %c0_i32 = arith.constant 0 : i32
    %c0_i32_0 = arith.constant 0 : i32
    return %arg0, %c0_i32 : i32, i32
  }
  func.func @transform_1(%arg0: i32) -> (i32, i32) {
    %c0_i32 = arith.constant 0 : i32
    %c0_i32_0 = arith.constant 0 : i32
    %c0_i32_1 = arith.constant 0 : i32
    return %c0_i32, %c0_i32_0 : i32, i32
  }
  func.func @transform_2(%arg0: i32) -> (i32, i32) {
    %c0_i32 = arith.constant 0 : i32
    %c0_i32_0 = arith.constant 0 : i32
    return %arg0, %c0_i32 : i32, i32
  }
  func.func @transform_3(%arg0: i32) -> (i32, i32) {
    %c0_i32 = arith.constant 0 : i32
    %c0_i32_0 = arith.constant 0 : i32
    return %arg0, %c0_i32 : i32, i32
  }
  func.func @transform_4(%arg0: i32) -> (i32, i32) {
    %c0_i32 = arith.constant 0 : i32
    %c0_i32_0 = arith.constant 0 : i32
    return %arg0, %c0_i32 : i32, i32
  }
}

</mosaic_0001>

<llo_original>
// kernel: se_gate_mul.1
$region0: #{se_gate_mul.1}
  #allocation0 [shape = 'u32[]', space=smem, size = 0x4, offset = 0x4, fixed_abs, tag = 'smem constant byte address 0x4 - core index']
  #allocation1 [shape = 'u32[144,128]{1,0:T(1,128)}', space=vmem, size = 0x12000, scoped, tag = 'internal scratch']
  %s0 = inlined_call_operand.vmem [shape: f32[1344,56], index: 0, kind: input, shape index: {}]
  %s1 = inlined_call_operand.vmem [shape: f32[56,1], index: 1, kind: input, shape index: {}]
  %s2 = inlined_call_operand.vmem [shape: f32[1344,1], index: 2, kind: input, shape index: {}]
  %s3 = inlined_call_operand.vmem [shape: f32[1344,196], index: 3, kind: input, shape index: {}, may-alias: {3,4}]
  %s4 = inlined_call_operand.vmem [shape: f32[1344,196], index: 4, kind: output, shape index: {}, may-alias: {3,4}]
  %s5 = sld [smem:[#allocation0]]
  $region49: #{se_gate_mul.1} parent=0
    _
  %s7 = ssub.s32 1, %s5
  %s8 = scalar_select 0, %s7, %s5
  loop: start=0, step=1, limit=4
  $region2: #{se_gate_mul.1} parent=0 // loop_pre_header
    _
  $region3: #{se_gate_mul.1} parent=0 // loop_header
    %s10 = sphi 0, %s14
    %p11 = scmp.ge.s32.totalorder %s10, 4
    %s20 = sphi 0, %s22
    %s23 = sphi 0, %s20
    %s24 = sphi 0, %s23
    %s40 = sphi 0, %s24
    %s44 = sphi 0, %s44
    %s46 = sphi 0, %s44
    %s47 = sphi 0, %s46
    %s61 = sphi 0, %s47
    %s67 = sphi 0, %s69
    %s70 = sphi 0, %s67
    %s71 = sphi 0, %s70
    %s87 = sphi 0, %s71
    %s93 = sphi 0, %s95
    %s96 = sphi 0, %s93
    %s97 = sphi 0, %s96
    %s113 = sphi 0, %s97
    %s119 = sphi 0, %s121
    %s122 = sphi 0, %s119
    %s123 = sphi 0, %s122
    %s139 = sphi 0, %s123
  $region4: #{se_gate_mul.1} parent=0 // loop_header_branch
    %13 = sbr.rel (%p11) target = $region8
  $region5: #{se_gate_mul.1} parent=0 // loop_body
    %s15 = ssub.s32 %s10, 1
    %s16 = ssub.s32 %s10, 2
    %s17 = sadd.s32 %s10, 1
    %s18 = ssub.s32 %s10, %s17
    %p19 = scmp.eq.s32.totalorder %s18, 0
    %s21 = sadd.s32 %s20, 1
    %s22 = scalar_select %p19, %s20, %s21
    %p25 = pneg %p19
    %p26 = scmp.eq.s32.totalorder %s10, 1
    %p27 = por %p25, %p26
    %p28 = scmp.ne.s32.totalorder %s20, %s23
    %p29 = scmp.eq.s32.totalorder %s10, 0
    %p30 = por %p28, %p29
    %p31 = scmp.ne.s32.totalorder %s20, %s23
    %p32 = scmp.eq.s32.totalorder %s15, 1
    %p33 = por %p31, %p32
    %p34 = scmp.ne.s32.totalorder %s23, %s24
    %p35 = scmp.eq.s32.totalorder %s15, 0
    %p36 = por %p34, %p35
    %p37 = scmp.ne.s32.totalorder %s23, %s24
    %p38 = scmp.eq.s32.totalorder %s16, 1
    %p39 = por %p37, %p38
    %p41 = scmp.ne.s32.totalorder %s24, %s40
    %p42 = scmp.eq.s32.totalorder %s16, 0
    %p43 = por %p41, %p42
    %s45 = sadd.s32 %s44, 1
    %p48 = scmp.eq.s32.totalorder %s10, 1
    %p49 = scmp.ne.s32.totalorder %s44, %s46
    %p50 = scmp.eq.s32.totalorder %s10, 0
    %p51 = por %p49, %p50
    %p52 = scmp.ne.s32.totalorder %s44, %s46
    %p53 = scmp.eq.s32.totalorder %s15, 1
    %p54 = por %p52, %p53
    %p55 = scmp.ne.s32.totalorder %s46, %s47
    %p56 = scmp.eq.s32.totalorder %s15, 0
    %p57 = por %p55, %p56
    %p58 = scmp.ne.s32.totalorder %s46, %s47
    %p59 = scmp.eq.s32.totalorder %s16, 1
    %p60 = por %p58, %p59
    %p62 = scmp.ne.s32.totalorder %s47, %s61
    %p63 = scmp.eq.s32.totalorder %s16, 0
    %p64 = por %p62, %p63
    %s65 = ssub.s32 %s10, %s17
    %p66 = scmp.eq.s32.totalorder %s65, 0
    %s68 = sadd.s32 %s67, 1
    %s69 = scalar_select %p66, %s67, %s68
    %p72 = pneg %p66
    %p73 = scmp.eq.s32.totalorder %s10, 1
    %p74 = por %p72, %p73
    %p75 = scmp.ne.s32.totalorder %s67, %s70
    %p76 = scmp.eq.s32.totalorder %s10, 0
    %p77 = por %p75, %p76
    %p78 = scmp.ne.s32.totalorder %s67, %s70
    %p79 = scmp.eq.s32.totalorder %s15, 1
    %p80 = por %p78, %p79
    %p81 = scmp.ne.s32.totalorder %s70, %s71
    %p82 = scmp.eq.s32.totalorder %s15, 0
    %p83 = por %p81, %p82
    %p84 = scmp.ne.s32.totalorder %s70, %s71
    %p85 = scmp.eq.s32.totalorder %s16, 1
    %p86 = por %p84, %p85
    %p88 = scmp.ne.s32.totalorder %s71, %s87
    %p89 = scmp.eq.s32.totalorder %s16, 0
    %p90 = por %p88, %p89
    %s91 = ssub.s32 %s10, %s17
    %p92 = scmp.eq.s32.totalorder %s91, 0
    %s94 = sadd.s32 %s93, 1
    %s95 = scalar_select %p92, %s93, %s94
    %p98 = pneg %p92
    %p99 = scmp.eq.s32.totalorder %s10, 1
    %p100 = por %p98, %p99
    %p101 = scmp.ne.s32.totalorder %s93, %s96
    %p102 = scmp.eq.s32.totalorder %s10, 0
    %p103 = por %p101, %p102
    %p104 = scmp.ne.s32.totalorder %s93, %s96
    %p105 = scmp.eq.s32.totalorder %s15, 1
    %p106 = por %p104, %p105
    %p107 = scmp.ne.s32.totalorder %s96, %s97
    %p108 = scmp.eq.s32.totalorder %s15, 0
    %p109 = por %p107, %p108
    %p110 = scmp.ne.s32.totalorder %s96, %s97
    %p111 = scmp.eq.s32.totalorder %s16, 1
    %p112 = por %p110, %p111
    %p114 = scmp.ne.s32.totalorder %s97, %s113
    %p115 = scmp.eq.s32.totalorder %s16, 0
    %p116 = por %p114, %p115
    %s117 = ssub.s32 %s10, %s17
    %p118 = scmp.eq.s32.totalorder %s117, 0
    %s120 = sadd.s32 %s119, 1
    %s121 = scalar_select %p118, %s119, %s120
    %p124 = pneg %p118
    %p125 = scmp.eq.s32.totalorder %s10, 1
    %p126 = por %p124, %p125
    %p127 = scmp.ne.s32.totalorder %s119, %s122
    %p128 = scmp.eq.s32.totalorder %s10, 0
    %p129 = por %p127, %p128
    %p130 = scmp.ne.s32.totalorder %s119, %s122
    %p131 = scmp.eq.s32.totalorder %s15, 1
    %p132 = por %p130, %p131
    %p133 = scmp.ne.s32.totalorder %s122, %s123
    %p134 = scmp.eq.s32.totalorder %s15, 0
    %p135 = por %p133, %p134
    %p136 = scmp.ne.s32.totalorder %s122, %s123
    %p137 = scmp.eq.s32.totalorder %s16, 1
    %p138 = por %p136, %p137
    %p140 = scmp.ne.s32.totalorder %s123, %s139
    %p141 = scmp.eq.s32.totalorder %s16, 0
    %p142 = por %p140, %p141
    %p143 = scmp.le.s32.totalorder 1, %s10
    %p144 = scmp.lt.s32.totalorder %s10, 3
    %p145 = pnand %p143, %p144
    %p146 = pneg %p145
    // Predicated region
    $region9: #{se_gate_mul.1} parent=5 // pred_check
      _
    $region10: #{se_gate_mul.1} parent=5 // pred_check_branch
      %148 = sbr.rel (%p145) target = $region12
    $region11: #{se_gate_mul.1} parent=5 // pred_region
      %s149 = ssub.s32 %s10, 1
      // Predicated region
      $region13: #{se_gate_mul.1} parent=11 // pred_check
        %p150 = pneg %p57
      $region14: #{se_gate_mul.1} parent=11 // pred_check_branch
        %152 = sbr.rel (%p150) target = $region16
      $region15: #{se_gate_mul.1} parent=11 // pred_region
        _
      $region16: #{se_gate_mul.1} parent=11 // pred_fallthru
        _
    $region12: #{se_gate_mul.1} parent=5 // pred_fallthru
      _
    %p153 = scmp.lt.s32.totalorder %s10, 2
    // Predicated region
    $region17: #{se_gate_mul.1} parent=5 // pred_check
      %p154 = pneg %p153
    $region18: #{se_gate_mul.1} parent=5 // pred_check_branch
      %156 = sbr.rel (%p154) target = $region20
    $region19: #{se_gate_mul.1} parent=5 // pred_region
      // Predicated region
      $region21: #{se_gate_mul.1} parent=19 // pred_check
        %p157 = pneg %p30
      $region22: #{se_gate_mul.1} parent=19 // pred_check_branch
        %159 = sbr.rel (%p157) target = $region24
      $region23: #{se_gate_mul.1} parent=19 // pred_region
        %s160 = smul.u32 84, %s10
        %p161 = scmp.lt.s32.totalorder %s160, 167
        %s162 = scalar_select %p161, %s160, 167
        %s163 = smul.addr %s162, 8
        %s164 = scalar_lea.vmem %s0, %s163
        %s165 = smul.u32 84, %s10
      $region24: #{se_gate_mul.1} parent=19 // pred_fallthru
        _
      // Predicated region
      $region25: #{se_gate_mul.1} parent=19 // pred_check
        %p166 = pneg %p77
      $region26: #{se_gate_mul.1} parent=19 // pred_check_branch
        %168 = sbr.rel (%p166) target = $region28
      $region27: #{se_gate_mul.1} parent=19 // pred_region
        %s169 = smul.u32 84, %s10
        %p170 = scmp.lt.s32.totalorder %s169, 167
        %s171 = scalar_select %p170, %s169, 167
        %s172 = smul.addr %s171, 8
        %s173 = scalar_lea.vmem %s2, %s172
        %s174 = smul.u32 84, %s10
      $region28: #{se_gate_mul.1} parent=19 // pred_fallthru
        _
      // Predicated region
      $region29: #{se_gate_mul.1} parent=19 // pred_check
        %p175 = pneg %p103
      $region30: #{se_gate_mul.1} parent=19 // pred_check_branch
        %177 = sbr.rel (%p175) target = $region32
      $region31: #{se_gate_mul.1} parent=19 // pred_region
        %s178 = smul.u32 84, %s10
        %p179 = scmp.lt.s32.totalorder %s178, 167
        %s180 = scalar_select %p179, %s178, 167
        %s181 = smul.addr %s180, 2
        %s182 = smul.addr %s181, 8
        %s183 = scalar_lea.vmem %s3, %s182
        %s184 = smul.u32 84, %s10
      $region32: #{se_gate_mul.1} parent=19 // pred_fallthru
        _
    $region20: #{se_gate_mul.1} parent=5 // pred_fallthru
      _
    %p185 = scmp.le.s32.totalorder 1, %s10
    %p186 = scmp.lt.s32.totalorder %s10, 3
    %p187 = pnand %p185, %p186
    %p188 = pneg %p187
    // Predicated region
    $region33: #{se_gate_mul.1} parent=5 // pred_check
      _
    $region34: #{se_gate_mul.1} parent=5 // pred_check_branch
      %190 = sbr.rel (%p187) target = $region36
    $region35: #{se_gate_mul.1} parent=5 // pred_region
      %s191 = ssub.s32 %s10, 1
      %s192 = smul.u32 84, %s15
      %p193 = scmp.lt.s32.totalorder %s192, 167
      %s194 = scalar_select %p193, %s192, 167
      %s195 = smul.addr %s194, 8
      %s196 = scalar_lea.vmem %s0, %s195
      %p197 = pneg %p36
      %p198 = pneg %p33
      %p199 = pneg %p57
      %p200 = pneg %p54
      %s201 = smul.u32 84, %s15
      %p202 = scmp.lt.s32.totalorder %s201, 167
      %s203 = scalar_select %p202, %s201, 167
      %s204 = smul.addr %s203, 8
      %s205 = scalar_lea.vmem %s2, %s204
      %p206 = pneg %p83
      %p207 = pneg %p80
      %s208 = smul.u32 84, %s15
      %p209 = scmp.lt.s32.totalorder %s208, 167
      %s210 = scalar_select %p209, %s208, 167
      %s211 = smul.addr %s210, 2
      %s212 = smul.addr %s211, 8
      %s213 = scalar_lea.vmem %s3, %s212
      %p214 = pneg %p109
      %p215 = pneg %p106
      %p216 = pneg %p135
      %p217 = pneg %p132
      %s218 = smul.u32 84, %s15
      %p219 = scmp.lt.s32.totalorder %s218, 167
      %s220 = scalar_select %p219, %s218, 167
      %s221 = smul.addr %s220, 2
      %s222 = smul.addr %s221, 8
      %s223 = scalar_lea.vmem %s4, %s222
      %s224 = smul.u32 84, %s15
      %p225 = scmp.lt.s32.totalorder %s224, 167
      %s226 = scalar_select %p225, %s224, 167
      %s227 = smul.addr %s226, 8
      %s228 = scalar_lea.vmem %s0, %s227
      %s229 = smul.u32 84, %s15
      %s230 = smul.u32 84, %s15
      %p231 = scmp.lt.s32.totalorder %s230, 167
      %s232 = scalar_select %p231, %s230, 167
      %s233 = smul.addr %s232, 8
      %s234 = scalar_lea.vmem %s2, %s233
      %s235 = smul.u32 84, %s15
      %s236 = smul.u32 84, %s15
      %p237 = scmp.lt.s32.totalorder %s236, 167
      %s238 = scalar_select %p237, %s236, 167
      %s239 = smul.addr %s238, 2
      %s240 = smul.addr %s239, 8
      %s241 = scalar_lea.vmem %s3, %s240
      %s242 = smul.u32 84, %s15
      %s243 = smul.u32 84, %s15
      %p244 = scmp.lt.s32.totalorder %s243, 167
      %s245 = scalar_select %p244, %s243, 167
      %s246 = smul.addr %s245, 2
      %s247 = smul.addr %s246, 8
      %s248 = scalar_lea.vmem %s4, %s247
      %s249 = smul.u32 84, %s15
      %v250 = vld [vmem:[%s228] sm:$0xff]
      %v251 = vld [vmem:[%s228 + $0x8] sm:$0xff]
      %v252 = vld [vmem:[%s228 + $0x10] sm:$0xff]
      %v253 = vld [vmem:[%s228 + $0x18] sm:$0xff]
      %v254 = vld [vmem:[%s228 + $0x20] sm:$0xff]
      %v255 = vld [vmem:[%s228 + $0x28] sm:$0xff]
      %v256 = vld [vmem:[%s228 + $0x30] sm:$0xff]
      %v257 = vld [vmem:[%s228 + $0x38] sm:$0xff]
      %v258 = vld [vmem:[%s228 + $0x40] sm:$0xff]
      %v259 = vld [vmem:[%s228 + $0x48] sm:$0xff]
      %v260 = vld [vmem:[%s228 + $0x50] sm:$0xff]
      %v261 = vld [vmem:[%s228 + $0x58] sm:$0xff]
      %v262 = vld [vmem:[%s228 + $0x60] sm:$0xff]
      %v263 = vld [vmem:[%s228 + $0x68] sm:$0xff]
      %v264 = vld [vmem:[%s228 + $0x70] sm:$0xff]
      %v265 = vld [vmem:[%s228 + $0x78] sm:$0xff]
      %v266 = vld [vmem:[%s228 + $0x80] sm:$0xff]
      %v267 = vld [vmem:[%s228 + $0x88] sm:$0xff]
      %v268 = vld [vmem:[%s228 + $0x90] sm:$0xff]
      %v269 = vld [vmem:[%s228 + $0x98] sm:$0xff]
      %v270 = vld [vmem:[%s228 + $0xa0] sm:$0xff]
      %v271 = vld [vmem:[%s228 + $0xa8] sm:$0xff]
      %v272 = vld [vmem:[%s228 + $0xb0] sm:$0xff]
      %v273 = vld [vmem:[%s228 + $0xb8] sm:$0xff]
      %v274 = vld [vmem:[%s228 + $0xc0] sm:$0xff]
      %v275 = vld [vmem:[%s228 + $0xc8] sm:$0xff]
      %v276 = vld [vmem:[%s228 + $0xd0] sm:$0xff]
      %v277 = vld [vmem:[%s228 + $0xd8] sm:$0xff]
      %v278 = vld [vmem:[%s228 + $0xe0] sm:$0xff]
      %v279 = vld [vmem:[%s228 + $0xe8] sm:$0xff]
      %v280 = vld [vmem:[%s228 + $0xf0] sm:$0xff]
      %v281 = vld [vmem:[%s228 + $0xf8] sm:$0xff]
      %v282 = vld [vmem:[%s228 + $0x100] sm:$0xff]
      %v283 = vld [vmem:[%s228 + $0x108] sm:$0xff]
      %v284 = vld [vmem:[%s228 + $0x110] sm:$0xff]
      %v285 = vld [vmem:[%s228 + $0x118] sm:$0xff]
      %v286 = vld [vmem:[%s228 + $0x120] sm:$0xff]
      %v287 = vld [vmem:[%s228 + $0x128] sm:$0xff]
      %v288 = vld [vmem:[%s228 + $0x130] sm:$0xff]
      %v289 = vld [vmem:[%s228 + $0x138] sm:$0xff]
      %v290 = vld [vmem:[%s228 + $0x140] sm:$0xff]
      %v291 = vld [vmem:[%s228 + $0x148] sm:$0xff]
      %v292 = vld [vmem:[%s228 + $0x150] sm:$0xff]
      %v293 = vld [vmem:[%s228 + $0x158] sm:$0xff]
      %v294 = vld [vmem:[%s228 + $0x160] sm:$0xff]
      %v295 = vld [vmem:[%s228 + $0x168] sm:$0xff]
      %v296 = vld [vmem:[%s228 + $0x170] sm:$0xff]
      %v297 = vld [vmem:[%s228 + $0x178] sm:$0xff]
      %v298 = vld [vmem:[%s228 + $0x180] sm:$0xff]
      %v299 = vld [vmem:[%s228 + $0x188] sm:$0xff]
      %v300 = vld [vmem:[%s228 + $0x190] sm:$0xff]
      %v301 = vld [vmem:[%s228 + $0x198] sm:$0xff]
      %v302 = vld [vmem:[%s228 + $0x1a0] sm:$0xff]
      %v303 = vld [vmem:[%s228 + $0x1a8] sm:$0xff]
      %v304 = vld [vmem:[%s228 + $0x1b0] sm:$0xff]
      %v305 = vld [vmem:[%s228 + $0x1b8] sm:$0xff]
      %v306 = vld [vmem:[%s228 + $0x1c0] sm:$0xff]
      %v307 = vld [vmem:[%s228 + $0x1c8] sm:$0xff]
      %v308 = vld [vmem:[%s228 + $0x1d0] sm:$0xff]
      %v309 = vld [vmem:[%s228 + $0x1d8] sm:$0xff]
      %v310 = vld [vmem:[%s228 + $0x1e0] sm:$0xff]
      %v311 = vld [vmem:[%s228 + $0x1e8] sm:$0xff]
      %v312 = vld [vmem:[%s228 + $0x1f0] sm:$0xff]
      %v313 = vld [vmem:[%s228 + $0x1f8] sm:$0xff]
      %v314 = vld [vmem:[%s228 + $0x200] sm:$0xff]
      %v315 = vld [vmem:[%s228 + $0x208] sm:$0xff]
      %v316 = vld [vmem:[%s228 + $0x210] sm:$0xff]
      %v317 = vld [vmem:[%s228 + $0x218] sm:$0xff]
      %v318 = vld [vmem:[%s228 + $0x220] sm:$0xff]
      %v319 = vld [vmem:[%s228 + $0x228] sm:$0xff]
      %v320 = vld [vmem:[%s228 + $0x230] sm:$0xff]
      %v321 = vld [vmem:[%s228 + $0x238] sm:$0xff]
      %v322 = vld [vmem:[%s228 + $0x240] sm:$0xff]
      %v323 = vld [vmem:[%s228 + $0x248] sm:$0xff]
      %v324 = vld [vmem:[%s228 + $0x250] sm:$0xff]
      %v325 = vld [vmem:[%s228 + $0x258] sm:$0xff]
      %v326 = vld [vmem:[%s228 + $0x260] sm:$0xff]
      %v327 = vld [vmem:[%s228 + $0x268] sm:$0xff]
      %v328 = vld [vmem:[%s228 + $0x270] sm:$0xff]
      %v329 = vld [vmem:[%s228 + $0x278] sm:$0xff]
      %v330 = vld [vmem:[%s228 + $0x280] sm:$0xff]
      %v331 = vld [vmem:[%s228 + $0x288] sm:$0xff]
      %v332 = vld [vmem:[%s228 + $0x290] sm:$0xff]
      %v333 = vld [vmem:[%s228 + $0x298] sm:$0xff]
      %v334 = vld [vmem:[%s1] sm:$0xff]
      %v335 = vld [vmem:[%s1 + $0x8] sm:$0xff]
      %v336 = vld [vmem:[%s1 + $0x10] sm:$0xff]
      %v337 = vld [vmem:[%s1 + $0x18] sm:$0xff]
      %v338 = vld [vmem:[%s1 + $0x20] sm:$0xff]
      %v339 = vld [vmem:[%s1 + $0x28] sm:$0xff]
      %v340 = vld [vmem:[%s1 + $0x30] sm:$0xff]
      %v341 = vld [vmem:[%s234] sm:$0xff]
      %v342 = vld [vmem:[%s234 + $0x8] sm:$0xff]
      %v343 = vld [vmem:[%s234 + $0x10] sm:$0xff]
      %v344 = vld [vmem:[%s234 + $0x18] sm:$0xff]
      %v345 = vld [vmem:[%s234 + $0x20] sm:$0xff]
      %v346 = vld [vmem:[%s234 + $0x28] sm:$0xff]
      %v347 = vld [vmem:[%s234 + $0x30] sm:$0xff]
      %v348 = vld [vmem:[%s234 + $0x38] sm:$0xff]
      %v349 = vld [vmem:[%s234 + $0x40] sm:$0xff]
      %v350 = vld [vmem:[%s234 + $0x48] sm:$0xff]
      %v351 = vld [vmem:[%s234 + $0x50] sm:$0xff]
      %v352 = vld [vmem:[%s234 + $0x58] sm:$0xff]
      %v353 = vld [vmem:[%s234 + $0x60] sm:$0xff]
      %v354 = vld [vmem:[%s234 + $0x68] sm:$0xff]
      %v355 = vld [vmem:[%s234 + $0x70] sm:$0xff]
      %v356 = vld [vmem:[%s234 + $0x78] sm:$0xff]
      %v357 = vld [vmem:[%s234 + $0x80] sm:$0xff]
      %v358 = vld [vmem:[%s234 + $0x88] sm:$0xff]
      %v359 = vld [vmem:[%s234 + $0x90] sm:$0xff]
      %v360 = vld [vmem:[%s234 + $0x98] sm:$0xff]
      %v361 = vld [vmem:[%s234 + $0xa0] sm:$0xff]
      %v362 = vld [vmem:[%s234 + $0xa8] sm:$0xff]
      %v363 = vld [vmem:[%s234 + $0xb0] sm:$0xff]
      %v364 = vld [vmem:[%s234 + $0xb8] sm:$0xff]
      %v365 = vld [vmem:[%s234 + $0xc0] sm:$0xff]
      %v366 = vld [vmem:[%s234 + $0xc8] sm:$0xff]
      %v367 = vld [vmem:[%s234 + $0xd0] sm:$0xff]
      %v368 = vld [vmem:[%s234 + $0xd8] sm:$0xff]
      %v369 = vld [vmem:[%s234 + $0xe0] sm:$0xff]
      %v370 = vld [vmem:[%s234 + $0xe8] sm:$0xff]
      %v371 = vld [vmem:[%s234 + $0xf0] sm:$0xff]
      %v372 = vld [vmem:[%s234 + $0xf8] sm:$0xff]
      %v373 = vld [vmem:[%s234 + $0x100] sm:$0xff]
      %v374 = vld [vmem:[%s234 + $0x108] sm:$0xff]
      %v375 = vld [vmem:[%s234 + $0x110] sm:$0xff]
      %v376 = vld [vmem:[%s234 + $0x118] sm:$0xff]
      %v377 = vld [vmem:[%s234 + $0x120] sm:$0xff]
      %v378 = vld [vmem:[%s234 + $0x128] sm:$0xff]
      %v379 = vld [vmem:[%s234 + $0x130] sm:$0xff]
      %v380 = vld [vmem:[%s234 + $0x138] sm:$0xff]
      %v381 = vld [vmem:[%s234 + $0x140] sm:$0xff]
      %v382 = vld [vmem:[%s234 + $0x148] sm:$0xff]
      %v383 = vld [vmem:[%s234 + $0x150] sm:$0xff]
      %v384 = vld [vmem:[%s234 + $0x158] sm:$0xff]
      %v385 = vld [vmem:[%s234 + $0x160] sm:$0xff]
      %v386 = vld [vmem:[%s234 + $0x168] sm:$0xff]
      %v387 = vld [vmem:[%s234 + $0x170] sm:$0xff]
      %v388 = vld [vmem:[%s234 + $0x178] sm:$0xff]
      %v389 = vld [vmem:[%s234 + $0x180] sm:$0xff]
      %v390 = vld [vmem:[%s234 + $0x188] sm:$0xff]
      %v391 = vld [vmem:[%s234 + $0x190] sm:$0xff]
      %v392 = vld [vmem:[%s234 + $0x198] sm:$0xff]
      %v393 = vld [vmem:[%s234 + $0x1a0] sm:$0xff]
      %v394 = vld [vmem:[%s234 + $0x1a8] sm:$0xff]
      %v395 = vld [vmem:[%s234 + $0x1b0] sm:$0xff]
      %v396 = vld [vmem:[%s234 + $0x1b8] sm:$0xff]
      %v397 = vld [vmem:[%s234 + $0x1c0] sm:$0xff]
      %v398 = vld [vmem:[%s234 + $0x1c8] sm:$0xff]
      %v399 = vld [vmem:[%s234 + $0x1d0] sm:$0xff]
      %v400 = vld [vmem:[%s234 + $0x1d8] sm:$0xff]
      %v401 = vld [vmem:[%s234 + $0x1e0] sm:$0xff]
      %v402 = vld [vmem:[%s234 + $0x1e8] sm:$0xff]
      %v403 = vld [vmem:[%s234 + $0x1f0] sm:$0xff]
      %v404 = vld [vmem:[%s234 + $0x1f8] sm:$0xff]
      %v405 = vld [vmem:[%s234 + $0x200] sm:$0xff]
      %v406 = vld [vmem:[%s234 + $0x208] sm:$0xff]
      %v407 = vld [vmem:[%s234 + $0x210] sm:$0xff]
      %v408 = vld [vmem:[%s234 + $0x218] sm:$0xff]
      %v409 = vld [vmem:[%s234 + $0x220] sm:$0xff]
      %v410 = vld [vmem:[%s234 + $0x228] sm:$0xff]
      %v411 = vld [vmem:[%s234 + $0x230] sm:$0xff]
      %v412 = vld [vmem:[%s234 + $0x238] sm:$0xff]
      %v413 = vld [vmem:[%s234 + $0x240] sm:$0xff]
      %v414 = vld [vmem:[%s234 + $0x248] sm:$0xff]
      %v415 = vld [vmem:[%s234 + $0x250] sm:$0xff]
      %v416 = vld [vmem:[%s234 + $0x258] sm:$0xff]
      %v417 = vld [vmem:[%s234 + $0x260] sm:$0xff]
      %v418 = vld [vmem:[%s234 + $0x268] sm:$0xff]
      %v419 = vld [vmem:[%s234 + $0x270] sm:$0xff]
      %v420 = vld [vmem:[%s234 + $0x278] sm:$0xff]
      %v421 = vld [vmem:[%s234 + $0x280] sm:$0xff]
      %v422 = vld [vmem:[%s234 + $0x288] sm:$0xff]
      %v423 = vld [vmem:[%s234 + $0x290] sm:$0xff]
      %v424 = vld [vmem:[%s234 + $0x298] sm:$0xff]
      %vm425 = vcmask 457728
      %v427 = vsel %vm425, %v250, 0
      %v430 = vsel %vm425, %v251, 0
      %v433 = vsel %vm425, %v252, 0
      %v436 = vsel %vm425, %v253, 0
      %v439 = vsel %vm425, %v254, 0
      %v442 = vsel %vm425, %v255, 0
      %v445 = vsel %vm425, %v256, 0
      %v448 = vsel %vm425, %v257, 0
      %v451 = vsel %vm425, %v258, 0
      %v454 = vsel %vm425, %v259, 0
      %v457 = vsel %vm425, %v260, 0
      %v460 = vsel %vm425, %v261, 0
      %v463 = vsel %vm425, %v262, 0
      %v466 = vsel %vm425, %v263, 0
      %v469 = vsel %vm425, %v264, 0
      %v472 = vsel %vm425, %v265, 0
      %v475 = vsel %vm425, %v266, 0
      %v478 = vsel %vm425, %v267, 0
      %v481 = vsel %vm425, %v268, 0
      %v484 = vsel %vm425, %v269, 0
      %v487 = vsel %vm425, %v270, 0
      %v490 = vsel %vm425, %v271, 0
      %v493 = vsel %vm425, %v272, 0
      %v496 = vsel %vm425, %v273, 0
      %v499 = vsel %vm425, %v274, 0
      %v502 = vsel %vm425, %v275, 0
      %v505 = vsel %vm425, %v276, 0
      %v508 = vsel %vm425, %v277, 0
      %v511 = vsel %vm425, %v278, 0
      %v514 = vsel %vm425, %v279, 0
      %v517 = vsel %vm425, %v280, 0
      %v520 = vsel %vm425, %v281, 0
      %v523 = vsel %vm425, %v282, 0
      %v526 = vsel %vm425, %v283, 0
      %v529 = vsel %vm425, %v284, 0
      %v532 = vsel %vm425, %v285, 0
      %v535 = vsel %vm425, %v286, 0
      %v538 = vsel %vm425, %v287, 0
      %v541 = vsel %vm425, %v288, 0
      %v544 = vsel %vm425, %v289, 0
      %v547 = vsel %vm425, %v290, 0
      %v550 = vsel %vm425, %v291, 0
      %v553 = vsel %vm425, %v292, 0
      %v556 = vsel %vm425, %v293, 0
      %v559 = vsel %vm425, %v294, 0
      %v562 = vsel %vm425, %v295, 0
      %v565 = vsel %vm425, %v296, 0
      %v568 = vsel %vm425, %v297, 0
      %v571 = vsel %vm425, %v298, 0
      %v574 = vsel %vm425, %v299, 0
      %v577 = vsel %vm425, %v300, 0
      %v580 = vsel %vm425, %v301, 0
      %v583 = vsel %vm425, %v302, 0
      %v586 = vsel %vm425, %v303, 0
      %v589 = vsel %vm425, %v304, 0
      %v592 = vsel %vm425, %v305, 0
      %v595 = vsel %vm425, %v306, 0
      %v598 = vsel %vm425, %v307, 0
      %v601 = vsel %vm425, %v308, 0
      %v604 = vsel %vm425, %v309, 0
      %v607 = vsel %vm425, %v310, 0
      %v610 = vsel %vm425, %v311, 0
      %v613 = vsel %vm425, %v312, 0
      %v616 = vsel %vm425, %v313, 0
      %v619 = vsel %vm425, %v314, 0
      %v622 = vsel %vm425, %v315, 0
      %v625 = vsel %vm425, %v316, 0
      %v628 = vsel %vm425, %v317, 0
      %v631 = vsel %vm425, %v318, 0
      %v634 = vsel %vm425, %v319, 0
      %v637 = vsel %vm425, %v320, 0
      %v640 = vsel %vm425, %v321, 0
      %v643 = vsel %vm425, %v322, 0
      %v646 = vsel %vm425, %v323, 0
      %v649 = vsel %vm425, %v324, 0
      %v652 = vsel %vm425, %v325, 0
      %v655 = vsel %vm425, %v326, 0
      %v658 = vsel %vm425, %v327, 0
      %v661 = vsel %vm425, %v328, 0
      %v664 = vsel %vm425, %v329, 0
      %v667 = vsel %vm425, %v330, 0
      %v670 = vsel %vm425, %v331, 0
      %v673 = vsel %vm425, %v332, 0
      %v676 = vsel %vm425, %v333, 0
      %678 = vmatprep.subr.mxu0 0.0
      %679 = vmatpush1.msra.mxu0 0.0
      %680 = vmatprep.subr.mxu0 0.0
      %681 = vmatpush1.msra.mxu0 0.0
      %682 = vmatprep.subr.mxu0 0.0
      %683 = vmatpush1.msra.mxu0 0.0
      %684 = vmatprep.subr.mxu0 0.0
      %685 = vmatpush1.msra.mxu0 0.0
      %686 = vmatprep.subr.mxu0 0.0
      %687 = vmatpush1.msra.mxu0 0.0
      %688 = vmatprep.subr.mxu0 0.0
      %689 = vmatpush1.msra.mxu0 0.0
      %690 = vmatprep.subr.mxu0 0.0
      %691 = vmatpush1.msra.mxu0 0.0
      %692 = vmatprep.subr.mxu0 0.0
      %693 = vmatpush1.msra.mxu0 0.0
      %694 = vmatprep.subr.mxu0 0.0
      %695 = vmatpush1.msra.mxu0 0.0
      %696 = vmatprep.subr.mxu0 0.0
      %697 = vmatpush1.msra.mxu0 %v340
      %698 = vmatprep.subr.mxu0 0.0
      %699 = vmatpush1.msra.mxu0 %v339
      %700 = vmatprep.subr.mxu0 0.0
      %701 = vmatpush1.msra.mxu0 %v338
      %702 = vmatprep.subr.mxu0 0.0
      %703 = vmatpush1.msra.mxu0 %v337
      %704 = vmatprep.subr.mxu0 0.0
      %705 = vmatpush1.msra.mxu0 %v336
      %706 = vmatprep.subr.mxu0 0.0
      %707 = vmatpush1.msra.mxu0 %v335
      %708 = vmatprep.subr.mxu0 0.0
      %709 = vmatpush1.msra.mxu0 %v334
      %710 = vmatprep.subr.mxu0 0.0
      %711 = vmatpush2.msra.mxu0 0.0
      %712 = vmatprep.subr.mxu0 0.0
      %713 = vmatpush2.msra.mxu0 0.0
      %714 = vmatprep.subr.mxu0 0.0
      %715 = vmatpush2.msra.mxu0 0.0
      %716 = vmatprep.subr.mxu0 0.0
      %717 = vmatpush2.msra.mxu0 0.0
      %718 = vmatprep.subr.mxu0 0.0
      %719 = vmatpush2.msra.mxu0 0.0
      %720 = vmatprep.subr.mxu0 0.0
      %721 = vmatpush2.msra.mxu0 0.0
      %722 = vmatprep.subr.mxu0 0.0
      %723 = vmatpush2.msra.mxu0 0.0
      %724 = vmatprep.subr.mxu0 0.0
      %725 = vmatpush2.msra.mxu0 0.0
      %726 = vmatprep.subr.mxu0 0.0
      %727 = vmatpush2.msra.mxu0 0.0
      %728 = vmatprep.subr.mxu0 0.0
      %729 = vmatpush2.msra.mxu0 0.0
      %730 = vmatprep.subr.mxu0 0.0
      %731 = vmatpush2.msra.mxu0 0.0
      %732 = vmatprep.subr.mxu0 0.0
      %733 = vmatpush2.msra.mxu0 0.0
      %734 = vmatprep.subr.mxu0 0.0
      %735 = vmatpush2.msra.mxu0 0.0
      %736 = vmatprep.subr.mxu0 0.0
      %737 = vmatpush2.msra.mxu0 0.0
      %738 = vmatprep.subr.mxu0 0.0
      %739 = vmatpush2.msra.mxu0 0.0
      %740 = vmatprep.subr.mxu0 0.0
      %741 = vmatpush2.msra.mxu0 0.0
      %742 = vmatprep.mubr.f32.mxu0 0.0
      %743 = vmatmul.mubr.f32.gmra.mxu0 %v427
      %v744 = vpop.f32.mrf.mxu0
      %v745 = vadd.f32 %v341, %v744
      %v746 = vpop.f32.mrf.mxu0
      %747 = vmatprep.mubr.f32.mxu0 0.0
      %748 = vmatmul.mubr.f32.gmra.mxu0 %v430
      %v749 = vpop.f32.mrf.mxu0
      %v750 = vadd.f32 %v342, %v749
      %v751 = vpop.f32.mrf.mxu0
      %752 = vmatprep.mubr.f32.mxu0 0.0
      %753 = vmatmul.mubr.f32.gmra.mxu0 %v433
      %v754 = vpop.f32.mrf.mxu0
      %v755 = vadd.f32 %v343, %v754
      %v756 = vpop.f32.mrf.mxu0
      %757 = vmatprep.mubr.f32.mxu0 0.0
      %758 = vmatmul.mubr.f32.gmra.mxu0 %v436
      %v759 = vpop.f32.mrf.mxu0
      %v760 = vadd.f32 %v344, %v759
      %v761 = vpop.f32.mrf.mxu0
      %762 = vmatprep.mubr.f32.mxu0 0.0
      %763 = vmatmul.mubr.f32.gmra.mxu0 %v439
      %v764 = vpop.f32.mrf.mxu0
      %v765 = vadd.f32 %v345, %v764
      %v766 = vpop.f32.mrf.mxu0
      %767 = vmatprep.mubr.f32.mxu0 0.0
      %768 = vmatmul.mubr.f32.gmra.mxu0 %v442
      %v769 = vpop.f32.mrf.mxu0
      %v770 = vadd.f32 %v346, %v769
      %v771 = vpop.f32.mrf.mxu0
      %772 = vmatprep.mubr.f32.mxu0 0.0
      %773 = vmatmul.mubr.f32.gmra.mxu0 %v445
      %v774 = vpop.f32.mrf.mxu0
      %v775 = vadd.f32 %v347, %v774
      %v776 = vpop.f32.mrf.mxu0
      %777 = vmatprep.mubr.f32.mxu0 0.0
      %778 = vmatmul.mubr.f32.gmra.mxu0 %v448
      %v779 = vpop.f32.mrf.mxu0
      %v780 = vadd.f32 %v348, %v779
      %v781 = vpop.f32.mrf.mxu0
      %782 = vmatprep.mubr.f32.mxu0 0.0
      %783 = vmatmul.mubr.f32.gmra.mxu0 %v451
      %v784 = vpop.f32.mrf.mxu0
      %v785 = vadd.f32 %v349, %v784
      %v786 = vpop.f32.mrf.mxu0
      %787 = vmatprep.mubr.f32.mxu0 0.0
      %788 = vmatmul.mubr.f32.gmra.mxu0 %v454
      %v789 = vpop.f32.mrf.mxu0
      %v790 = vadd.f32 %v350, %v789
      %v791 = vpop.f32.mrf.mxu0
      %792 = vmatprep.mubr.f32.mxu0 0.0
      %793 = vmatmul.mubr.f32.gmra.mxu0 %v457
      %v794 = vpop.f32.mrf.mxu0
      %v795 = vadd.f32 %v351, %v794
      %v796 = vpop.f32.mrf.mxu0
      %797 = vmatprep.mubr.f32.mxu0 0.0
      %798 = vmatmul.mubr.f32.gmra.mxu0 %v460
      %v799 = vpop.f32.mrf.mxu0
      %v800 = vadd.f32 %v352, %v799
      %v801 = vpop.f32.mrf.mxu0
      %802 = vmatprep.mubr.f32.mxu0 0.0
      %803 = vmatmul.mubr.f32.gmra.mxu0 %v463
      %v804 = vpop.f32.mrf.mxu0
      %v805 = vadd.f32 %v353, %v804
      %v806 = vpop.f32.mrf.mxu0
      %807 = vmatprep.mubr.f32.mxu0 0.0
      %808 = vmatmul.mubr.f32.gmra.mxu0 %v466
      %v809 = vpop.f32.mrf.mxu0
      %v810 = vadd.f32 %v354, %v809
      %v811 = vpop.f32.mrf.mxu0
      %812 = vmatprep.mubr.f32.mxu0 0.0
      %813 = vmatmul.mubr.f32.gmra.mxu0 %v469
      %v814 = vpop.f32.mrf.mxu0
      %v815 = vadd.f32 %v355, %v814
      %v816 = vpop.f32.mrf.mxu0
      %817 = vmatprep.mubr.f32.mxu0 0.0
      %818 = vmatmul.mubr.f32.gmra.mxu0 %v472
      %v819 = vpop.f32.mrf.mxu0
      %v820 = vadd.f32 %v356, %v819
      %v821 = vpop.f32.mrf.mxu0
      %822 = vmatprep.mubr.f32.mxu0 0.0
      %823 = vmatmul.mubr.f32.gmra.mxu0 %v475
      %v824 = vpop.f32.mrf.mxu0
      %v825 = vadd.f32 %v357, %v824
      %v826 = vpop.f32.mrf.mxu0
      %827 = vmatprep.mubr.f32.mxu0 0.0
      %828 = vmatmul.mubr.f32.gmra.mxu0 %v478
      %v829 = vpop.f32.mrf.mxu0
      %v830 = vadd.f32 %v358, %v829
      %v831 = vpop.f32.mrf.mxu0
      %832 = vmatprep.mubr.f32.mxu0 0.0
      %833 = vmatmul.mubr.f32.gmra.mxu0 %v481
      %v834 = vpop.f32.mrf.mxu0
      %v835 = vadd.f32 %v359, %v834
      %v836 = vpop.f32.mrf.mxu0
      %837 = vmatprep.mubr.f32.mxu0 0.0
      %838 = vmatmul.mubr.f32.gmra.mxu0 %v484
      %v839 = vpop.f32.mrf.mxu0
      %v840 = vadd.f32 %v360, %v839
      %v841 = vpop.f32.mrf.mxu0
      %842 = vmatprep.mubr.f32.mxu0 0.0
      %843 = vmatmul.mubr.f32.gmra.mxu0 %v487
      %v844 = vpop.f32.mrf.mxu0
      %v845 = vadd.f32 %v361, %v844
      %v846 = vpop.f32.mrf.mxu0
      %847 = vmatprep.mubr.f32.mxu0 0.0
      %848 = vmatmul.mubr.f32.gmra.mxu0 %v490
      %v849 = vpop.f32.mrf.mxu0
      %v850 = vadd.f32 %v362, %v849
      %v851 = vpop.f32.mrf.mxu0
      %852 = vmatprep.mubr.f32.mxu0 0.0
      %853 = vmatmul.mubr.f32.gmra.mxu0 %v493
      %v854 = vpop.f32.mrf.mxu0
      %v855 = vadd.f32 %v363, %v854
      %v856 = vpop.f32.mrf.mxu0
      %857 = vmatprep.mubr.f32.mxu0 0.0
      %858 = vmatmul.mubr.f32.gmra.mxu0 %v496
      %v859 = vpop.f32.mrf.mxu0
      %v860 = vadd.f32 %v364, %v859
      %v861 = vpop.f32.mrf.mxu0
      %862 = vmatprep.mubr.f32.mxu0 0.0
      %863 = vmatmul.mubr.f32.gmra.mxu0 %v499
      %v864 = vpop.f32.mrf.mxu0
      %v865 = vadd.f32 %v365, %v864
      %v866 = vpop.f32.mrf.mxu0
      %867 = vmatprep.mubr.f32.mxu0 0.0
      %868 = vmatmul.mubr.f32.gmra.mxu0 %v502
      %v869 = vpop.f32.mrf.mxu0
      %v870 = vadd.f32 %v366, %v869
      %v871 = vpop.f32.mrf.mxu0
      %872 = vmatprep.mubr.f32.mxu0 0.0
      %873 = vmatmul.mubr.f32.gmra.mxu0 %v505
      %v874 = vpop.f32.mrf.mxu0
      %v875 = vadd.f32 %v367, %v874
      %v876 = vpop.f32.mrf.mxu0
      %877 = vmatprep.mubr.f32.mxu0 0.0
      %878 = vmatmul.mubr.f32.gmra.mxu0 %v508
      %v879 = vpop.f32.mrf.mxu0
      %v880 = vadd.f32 %v368, %v879
      %v881 = vpop.f32.mrf.mxu0
      %882 = vmatprep.mubr.f32.mxu0 0.0
      %883 = vmatmul.mubr.f32.gmra.mxu0 %v511
      %v884 = vpop.f32.mrf.mxu0
      %v885 = vadd.f32 %v369, %v884
      %v886 = vpop.f32.mrf.mxu0
      %887 = vmatprep.mubr.f32.mxu0 0.0
      %888 = vmatmul.mubr.f32.gmra.mxu0 %v514
      %v889 = vpop.f32.mrf.mxu0
      %v890 = vadd.f32 %v370, %v889
      %v891 = vpop.f32.mrf.mxu0
      %892 = vmatprep.mubr.f32.mxu0 0.0
      %893 = vmatmul.mubr.f32.gmra.mxu0 %v517
      %v894 = vpop.f32.mrf.mxu0
      %v895 = vadd.f32 %v371, %v894
      %v896 = vpop.f32.mrf.mxu0
      %897 = vmatprep.mubr.f32.mxu0 0.0
      %898 = vmatmul.mubr.f32.gmra.mxu0 %v520
      %v899 = vpop.f32.mrf.mxu0
      %v900 = vadd.f32 %v372, %v899
      %v901 = vpop.f32.mrf.mxu0
      %902 = vmatprep.mubr.f32.mxu0 0.0
      %903 = vmatmul.mubr.f32.gmra.mxu0 %v523
      %v904 = vpop.f32.mrf.mxu0
      %v905 = vadd.f32 %v373, %v904
      %v906 = vpop.f32.mrf.mxu0
      %907 = vmatprep.mubr.f32.mxu0 0.0
      %908 = vmatmul.mubr.f32.gmra.mxu0 %v526
      %v909 = vpop.f32.mrf.mxu0
      %v910 = vadd.f32 %v374, %v909
      %v911 = vpop.f32.mrf.mxu0
      %912 = vmatprep.mubr.f32.mxu0 0.0
      %913 = vmatmul.mubr.f32.gmra.mxu0 %v529
      %v914 = vpop.f32.mrf.mxu0
      %v915 = vadd.f32 %v375, %v914
      %v916 = vpop.f32.mrf.mxu0
      %917 = vmatprep.mubr.f32.mxu0 0.0
      %918 = vmatmul.mubr.f32.gmra.mxu0 %v532
      %v919 = vpop.f32.mrf.mxu0
      %v920 = vadd.f32 %v376, %v919
      %v921 = vpop.f32.mrf.mxu0
      %922 = vmatprep.mubr.f32.mxu0 0.0
      %923 = vmatmul.mubr.f32.gmra.mxu0 %v535
      %v924 = vpop.f32.mrf.mxu0
      %v925 = vadd.f32 %v377, %v924
      %v926 = vpop.f32.mrf.mxu0
      %927 = vmatprep.mubr.f32.mxu0 0.0
      %928 = vmatmul.mubr.f32.gmra.mxu0 %v538
      %v929 = vpop.f32.mrf.mxu0
      %v930 = vadd.f32 %v378, %v929
      %v931 = vpop.f32.mrf.mxu0
      %932 = vmatprep.mubr.f32.mxu0 0.0
      %933 = vmatmul.mubr.f32.gmra.mxu0 %v541
      %v934 = vpop.f32.mrf.mxu0
      %v935 = vadd.f32 %v379, %v934
      %v936 = vpop.f32.mrf.mxu0
      %937 = vmatprep.mubr.f32.mxu0 0.0
      %938 = vmatmul.mubr.f32.gmra.mxu0 %v544
      %v939 = vpop.f32.mrf.mxu0
      %v940 = vadd.f32 %v380, %v939
      %v941 = vpop.f32.mrf.mxu0
      %942 = vmatprep.mubr.f32.mxu0 0.0
      %943 = vmatmul.mubr.f32.gmra.mxu0 %v547
      %v944 = vpop.f32.mrf.mxu0
      %v945 = vadd.f32 %v381, %v944
      %v946 = vpop.f32.mrf.mxu0
      %947 = vmatprep.mubr.f32.mxu0 0.0
      %948 = vmatmul.mubr.f32.gmra.mxu0 %v550
      %v949 = vpop.f32.mrf.mxu0
      %v950 = vadd.f32 %v382, %v949
      %v951 = vpop.f32.mrf.mxu0
      %952 = vmatprep.mubr.f32.mxu0 0.0
      %953 = vmatmul.mubr.f32.gmra.mxu0 %v553
      %v954 = vpop.f32.mrf.mxu0
      %v955 = vadd.f32 %v383, %v954
      %v956 = vpop.f32.mrf.mxu0
      %957 = vmatprep.mubr.f32.mxu0 0.0
      %958 = vmatmul.mubr.f32.gmra.mxu0 %v556
      %v959 = vpop.f32.mrf.mxu0
      %v960 = vadd.f32 %v384, %v959
      %v961 = vpop.f32.mrf.mxu0
      %962 = vmatprep.mubr.f32.mxu0 0.0
      %963 = vmatmul.mubr.f32.gmra.mxu0 %v559
      %v964 = vpop.f32.mrf.mxu0
      %v965 = vadd.f32 %v385, %v964
      %v966 = vpop.f32.mrf.mxu0
      %967 = vmatprep.mubr.f32.mxu0 0.0
      %968 = vmatmul.mubr.f32.gmra.mxu0 %v562
      %v969 = vpop.f32.mrf.mxu0
      %v970 = vadd.f32 %v386, %v969
      %v971 = vpop.f32.mrf.mxu0
      %972 = vmatprep.mubr.f32.mxu0 0.0
      %973 = vmatmul.mubr.f32.gmra.mxu0 %v565
      %v974 = vpop.f32.mrf.mxu0
      %v975 = vadd.f32 %v387, %v974
      %v976 = vpop.f32.mrf.mxu0
      %977 = vmatprep.mubr.f32.mxu0 0.0
      %978 = vmatmul.mubr.f32.gmra.mxu0 %v568
      %v979 = vpop.f32.mrf.mxu0
      %v980 = vadd.f32 %v388, %v979
      %v981 = vpop.f32.mrf.mxu0
      %982 = vmatprep.mubr.f32.mxu0 0.0
      %983 = vmatmul.mubr.f32.gmra.mxu0 %v571
      %v984 = vpop.f32.mrf.mxu0
      %v985 = vadd.f32 %v389, %v984
      %v986 = vpop.f32.mrf.mxu0
      %987 = vmatprep.mubr.f32.mxu0 0.0
      %988 = vmatmul.mubr.f32.gmra.mxu0 %v574
      %v989 = vpop.f32.mrf.mxu0
      %v990 = vadd.f32 %v390, %v989
      %v991 = vpop.f32.mrf.mxu0
      %992 = vmatprep.mubr.f32.mxu0 0.0
      %993 = vmatmul.mubr.f32.gmra.mxu0 %v577
      %v994 = vpop.f32.mrf.mxu0
      %v995 = vadd.f32 %v391, %v994
      %v996 = vpop.f32.mrf.mxu0
      %997 = vmatprep.mubr.f32.mxu0 0.0
      %998 = vmatmul.mubr.f32.gmra.mxu0 %v580
      %v999 = vpop.f32.mrf.mxu0
      %v1000 = vadd.f32 %v392, %v999
      %v1001 = vpop.f32.mrf.mxu0
      %1002 = vmatprep.mubr.f32.mxu0 0.0
      %1003 = vmatmul.mubr.f32.gmra.mxu0 %v583
      %v1004 = vpop.f32.mrf.mxu0
      %v1005 = vadd.f32 %v393, %v1004
      %v1006 = vpop.f32.mrf.mxu0
      %1007 = vmatprep.mubr.f32.mxu0 0.0
      %1008 = vmatmul.mubr.f32.gmra.mxu0 %v586
      %v1009 = vpop.f32.mrf.mxu0
      %v1010 = vadd.f32 %v394, %v1009
      %v1011 = vpop.f32.mrf.mxu0
      %1012 = vmatprep.mubr.f32.mxu0 0.0
      %1013 = vmatmul.mubr.f32.gmra.mxu0 %v589
      %v1014 = vpop.f32.mrf.mxu0
      %v1015 = vadd.f32 %v395, %v1014
      %v1016 = vpop.f32.mrf.mxu0
      %1017 = vmatprep.mubr.f32.mxu0 0.0
      %1018 = vmatmul.mubr.f32.gmra.mxu0 %v592
      %v1019 = vpop.f32.mrf.mxu0
      %v1020 = vadd.f32 %v396, %v1019
      %v1021 = vpop.f32.mrf.mxu0
      %1022 = vmatprep.mubr.f32.mxu0 0.0
      %1023 = vmatmul.mubr.f32.gmra.mxu0 %v595
      %v1024 = vpop.f32.mrf.mxu0
      %v1025 = vadd.f32 %v397, %v1024
      %v1026 = vpop.f32.mrf.mxu0
      %1027 = vmatprep.mubr.f32.mxu0 0.0
      %1028 = vmatmul.mubr.f32.gmra.mxu0 %v598
      %v1029 = vpop.f32.mrf.mxu0
      %v1030 = vadd.f32 %v398, %v1029
      %v1031 = vpop.f32.mrf.mxu0
      %1032 = vmatprep.mubr.f32.mxu0 0.0
      %1033 = vmatmul.mubr.f32.gmra.mxu0 %v601
      %v1034 = vpop.f32.mrf.mxu0
      %v1035 = vadd.f32 %v399, %v1034
      %v1036 = vpop.f32.mrf.mxu0
      %1037 = vmatprep.mubr.f32.mxu0 0.0
      %1038 = vmatmul.mubr.f32.gmra.mxu0 %v604
      %v1039 = vpop.f32.mrf.mxu0
      %v1040 = vadd.f32 %v400, %v1039
      %v1041 = vpop.f32.mrf.mxu0
      %1042 = vmatprep.mubr.f32.mxu0 0.0
      %1043 = vmatmul.mubr.f32.gmra.mxu0 %v607
      %v1044 = vpop.f32.mrf.mxu0
      %v1045 = vadd.f32 %v401, %v1044
      %v1046 = vpop.f32.mrf.mxu0
      %1047 = vmatprep.mubr.f32.mxu0 0.0
      %1048 = vmatmul.mubr.f32.gmra.mxu0 %v610
      %v1049 = vpop.f32.mrf.mxu0
      %v1050 = vadd.f32 %v402, %v1049
      %v1051 = vpop.f32.mrf.mxu0
      %1052 = vmatprep.mubr.f32.mxu0 0.0
      %1053 = vmatmul.mubr.f32.gmra.mxu0 %v613
      %v1054 = vpop.f32.mrf.mxu0
      %v1055 = vadd.f32 %v403, %v1054
      %v1056 = vpop.f32.mrf.mxu0
      %1057 = vmatprep.mubr.f32.mxu0 0.0
      %1058 = vmatmul.mubr.f32.gmra.mxu0 %v616
      %v1059 = vpop.f32.mrf.mxu0
      %v1060 = vadd.f32 %v404, %v1059
      %v1061 = vpop.f32.mrf.mxu0
      %1062 = vmatprep.mubr.f32.mxu0 0.0
      %1063 = vmatmul.mubr.f32.gmra.mxu0 %v619
      %v1064 = vpop.f32.mrf.mxu0
      %v1065 = vadd.f32 %v405, %v1064
      %v1066 = vpop.f32.mrf.mxu0
      %1067 = vmatprep.mubr.f32.mxu0 0.0
      %1068 = vmatmul.mubr.f32.gmra.mxu0 %v622
      %v1069 = vpop.f32.mrf.mxu0
      %v1070 = vadd.f32 %v406, %v1069
      %v1071 = vpop.f32.mrf.mxu0
      %1072 = vmatprep.mubr.f32.mxu0 0.0
      %1073 = vmatmul.mubr.f32.gmra.mxu0 %v625
      %v1074 = vpop.f32.mrf.mxu0
      %v1075 = vadd.f32 %v407, %v1074
      %v1076 = vpop.f32.mrf.mxu0
      %1077 = vmatprep.mubr.f32.mxu0 0.0
      %1078 = vmatmul.mubr.f32.gmra.mxu0 %v628
      %v1079 = vpop.f32.mrf.mxu0
      %v1080 = vadd.f32 %v408, %v1079
      %v1081 = vpop.f32.mrf.mxu0
      %1082 = vmatprep.mubr.f32.mxu0 0.0
      %1083 = vmatmul.mubr.f32.gmra.mxu0 %v631
      %v1084 = vpop.f32.mrf.mxu0
      %v1085 = vadd.f32 %v409, %v1084
      %v1086 = vpop.f32.mrf.mxu0
      %1087 = vmatprep.mubr.f32.mxu0 0.0
      %1088 = vmatmul.mubr.f32.gmra.mxu0 %v634
      %v1089 = vpop.f32.mrf.mxu0
      %v1090 = vadd.f32 %v410, %v1089
      %v1091 = vpop.f32.mrf.mxu0
      %1092 = vmatprep.mubr.f32.mxu0 0.0
      %1093 = vmatmul.mubr.f32.gmra.mxu0 %v637
      %v1094 = vpop.f32.mrf.mxu0
      %v1095 = vadd.f32 %v411, %v1094
      %v1096 = vpop.f32.mrf.mxu0
      %1097 = vmatprep.mubr.f32.mxu0 0.0
      %1098 = vmatmul.mubr.f32.gmra.mxu0 %v640
      %v1099 = vpop.f32.mrf.mxu0
      %v1100 = vadd.f32 %v412, %v1099
      %v1101 = vpop.f32.mrf.mxu0
      %1102 = vmatprep.mubr.f32.mxu0 0.0
      %1103 = vmatmul.mubr.f32.gmra.mxu0 %v643
      %v1104 = vpop.f32.mrf.mxu0
      %v1105 = vadd.f32 %v413, %v1104
      %v1106 = vpop.f32.mrf.mxu0
      %1107 = vmatprep.mubr.f32.mxu0 0.0
      %1108 = vmatmul.mubr.f32.gmra.mxu0 %v646
      %v1109 = vpop.f32.mrf.mxu0
      %v1110 = vadd.f32 %v414, %v1109
      %v1111 = vpop.f32.mrf.mxu0
      %1112 = vmatprep.mubr.f32.mxu0 0.0
      %1113 = vmatmul.mubr.f32.gmra.mxu0 %v649
      %v1114 = vpop.f32.mrf.mxu0
      %v1115 = vadd.f32 %v415, %v1114
      %v1116 = vpop.f32.mrf.mxu0
      %1117 = vmatprep.mubr.f32.mxu0 0.0
      %1118 = vmatmul.mubr.f32.gmra.mxu0 %v652
      %v1119 = vpop.f32.mrf.mxu0
      %v1120 = vadd.f32 %v416, %v1119
      %v1121 = vpop.f32.mrf.mxu0
      %1122 = vmatprep.mubr.f32.mxu0 0.0
      %1123 = vmatmul.mubr.f32.gmra.mxu0 %v655
      %v1124 = vpop.f32.mrf.mxu0
      %v1125 = vadd.f32 %v417, %v1124
      %v1126 = vpop.f32.mrf.mxu0
      %1127 = vmatprep.mubr.f32.mxu0 0.0
      %1128 = vmatmul.mubr.f32.gmra.mxu0 %v658
      %v1129 = vpop.f32.mrf.mxu0
      %v1130 = vadd.f32 %v418, %v1129
      %v1131 = vpop.f32.mrf.mxu0
      %1132 = vmatprep.mubr.f32.mxu0 0.0
      %1133 = vmatmul.mubr.f32.gmra.mxu0 %v661
      %v1134 = vpop.f32.mrf.mxu0
      %v1135 = vadd.f32 %v419, %v1134
      %v1136 = vpop.f32.mrf.mxu0
      %1137 = vmatprep.mubr.f32.mxu0 0.0
      %1138 = vmatmul.mubr.f32.gmra.mxu0 %v664
      %v1139 = vpop.f32.mrf.mxu0
      %v1140 = vadd.f32 %v420, %v1139
      %v1141 = vpop.f32.mrf.mxu0
      %1142 = vmatprep.mubr.f32.mxu0 0.0
      %1143 = vmatmul.mubr.f32.gmra.mxu0 %v667
      %v1144 = vpop.f32.mrf.mxu0
      %v1145 = vadd.f32 %v421, %v1144
      %v1146 = vpop.f32.mrf.mxu0
      %1147 = vmatprep.mubr.f32.mxu0 0.0
      %1148 = vmatmul.mubr.f32.gmra.mxu0 %v670
      %v1149 = vpop.f32.mrf.mxu0
      %v1150 = vadd.f32 %v422, %v1149
      %v1151 = vpop.f32.mrf.mxu0
      %1152 = vmatprep.mubr.f32.mxu0 0.0
      %1153 = vmatmul.mubr.f32.gmra.mxu0 %v673
      %v1154 = vpop.f32.mrf.mxu0
      %v1155 = vadd.f32 %v423, %v1154
      %v1156 = vpop.f32.mrf.mxu0
      %1157 = vmatprep.mubr.f32.mxu0 0.0
      %1158 = vmatmul.mubr.f32.gmra.mxu0 %v676
      %v1159 = vpop.f32.mrf.mxu0
      %v1160 = vadd.f32 %v424, %v1159
      %v1161 = vpop.f32.mrf.mxu0
      %1162 = vdwg.mxu0
      %v1163 = vxor.u32 %v745, 2147483648
      %v1164 = vxor.u32 %v750, 2147483648
      %v1165 = vxor.u32 %v755, 2147483648
      %v1166 = vxor.u32 %v760, 2147483648
      %v1167 = vxor.u32 %v765, 2147483648
      %v1168 = vxor.u32 %v770, 2147483648
      %v1169 = vxor.u32 %v775, 2147483648
      %v1170 = vxor.u32 %v780, 2147483648
      %v1171 = vxor.u32 %v785, 2147483648
      %v1172 = vxor.u32 %v790, 2147483648
      %v1173 = vxor.u32 %v795, 2147483648
      %v1174 = vxor.u32 %v800, 2147483648
      %v1175 = vxor.u32 %v805, 2147483648
      %v1176 = vxor.u32 %v810, 2147483648
      %v1177 = vxor.u32 %v815, 2147483648
      %v1178 = vxor.u32 %v820, 2147483648
      %v1179 = vxor.u32 %v825, 2147483648
      %v1180 = vxor.u32 %v830, 2147483648
      %v1181 = vxor.u32 %v835, 2147483648
      %v1182 = vxor.u32 %v840, 2147483648
      %v1183 = vxor.u32 %v845, 2147483648
      %v1184 = vxor.u32 %v850, 2147483648
      %v1185 = vxor.u32 %v855, 2147483648
      %v1186 = vxor.u32 %v860, 2147483648
      %v1187 = vxor.u32 %v865, 2147483648
      %v1188 = vxor.u32 %v870, 2147483648
      %v1189 = vxor.u32 %v875, 2147483648
      %v1190 = vxor.u32 %v880, 2147483648
      %v1191 = vxor.u32 %v885, 2147483648
      %v1192 = vxor.u32 %v890, 2147483648
      %v1193 = vxor.u32 %v895, 2147483648
      %v1194 = vxor.u32 %v900, 2147483648
      %v1195 = vxor.u32 %v905, 2147483648
      %v1196 = vxor.u32 %v910, 2147483648
      %v1197 = vxor.u32 %v915, 2147483648
      %v1198 = vxor.u32 %v920, 2147483648
      %v1199 = vxor.u32 %v925, 2147483648
      %v1200 = vxor.u32 %v930, 2147483648
      %v1201 = vxor.u32 %v935, 2147483648
      %v1202 = vxor.u32 %v940, 2147483648
      %v1203 = vxor.u32 %v945, 2147483648
      %v1204 = vxor.u32 %v950, 2147483648
      %v1205 = vxor.u32 %v955, 2147483648
      %v1206 = vxor.u32 %v960, 2147483648
      %v1207 = vxor.u32 %v965, 2147483648
      %v1208 = vxor.u32 %v970, 2147483648
      %v1209 = vxor.u32 %v975, 2147483648
      %v1210 = vxor.u32 %v980, 2147483648
      %v1211 = vxor.u32 %v985, 2147483648
      %v1212 = vxor.u32 %v990, 2147483648
      %v1213 = vxor.u32 %v995, 2147483648
      %v1214 = vxor.u32 %v1000, 2147483648
      %v1215 = vxor.u32 %v1005, 2147483648
      %v1216 = vxor.u32 %v1010, 2147483648
      %v1217 = vxor.u32 %v1015, 2147483648
      %v1218 = vxor.u32 %v1020, 2147483648
      %v1219 = vxor.u32 %v1025, 2147483648
      %v1220 = vxor.u32 %v1030, 2147483648
      %v1221 = vxor.u32 %v1035, 2147483648
      %v1222 = vxor.u32 %v1040, 2147483648
      %v1223 = vxor.u32 %v1045, 2147483648
      %v1224 = vxor.u32 %v1050, 2147483648
      %v1225 = vxor.u32 %v1055, 2147483648
      %v1226 = vxor.u32 %v1060, 2147483648
      %v1227 = vxor.u32 %v1065, 2147483648
      %v1228 = vxor.u32 %v1070, 2147483648
      %v1229 = vxor.u32 %v1075, 2147483648
      %v1230 = vxor.u32 %v1080, 2147483648
      %v1231 = vxor.u32 %v1085, 2147483648
      %v1232 = vxor.u32 %v1090, 2147483648
      %v1233 = vxor.u32 %v1095, 2147483648
      %v1234 = vxor.u32 %v1100, 2147483648
      %v1235 = vxor.u32 %v1105, 2147483648
      %v1236 = vxor.u32 %v1110, 2147483648
      %v1237 = vxor.u32 %v1115, 2147483648
      %v1238 = vxor.u32 %v1120, 2147483648
      %v1239 = vxor.u32 %v1125, 2147483648
      %v1240 = vxor.u32 %v1130, 2147483648
      %v1241 = vxor.u32 %v1135, 2147483648
      %v1242 = vxor.u32 %v1140, 2147483648
      %v1243 = vxor.u32 %v1145, 2147483648
      %v1244 = vxor.u32 %v1150, 2147483648
      %v1245 = vxor.u32 %v1155, 2147483648
      %v1246 = vxor.u32 %v1160, 2147483648
      %v1247 = vmul.f32 %v1163, 1.442695
      %v1248 = vpow.pop %v1247
      %v1249 = vmul.f32 %v1164, 1.442695
      %v1250 = vpow.pop %v1249
      %v1251 = vmul.f32 %v1165, 1.442695
      %v1252 = vpow.pop %v1251
      %v1253 = vmul.f32 %v1166, 1.442695
      %v1254 = vpow.pop %v1253
      %v1255 = vmul.f32 %v1167, 1.442695
      %v1256 = vpow.pop %v1255
      %v1257 = vmul.f32 %v1168, 1.442695
      %v1258 = vpow.pop %v1257
      %v1259 = vmul.f32 %v1169, 1.442695
      %v1260 = vpow.pop %v1259
      %v1261 = vmul.f32 %v1170, 1.442695
      %v1262 = vpow.pop %v1261
      %v1263 = vmul.f32 %v1171, 1.442695
      %v1264 = vpow.pop %v1263
      %v1265 = vmul.f32 %v1172, 1.442695
      %v1266 = vpow.pop %v1265
      %v1267 = vmul.f32 %v1173, 1.442695
      %v1268 = vpow.pop %v1267
      %v1269 = vmul.f32 %v1174, 1.442695
      %v1270 = vpow.pop %v1269
      %v1271 = vmul.f32 %v1175, 1.442695
      %v1272 = vpow.pop %v1271
      %v1273 = vmul.f32 %v1176, 1.442695
      %v1274 = vpow.pop %v1273
      %v1275 = vmul.f32 %v1177, 1.442695
      %v1276 = vpow.pop %v1275
      %v1277 = vmul.f32 %v1178, 1.442695
      %v1278 = vpow.pop %v1277
      %v1279 = vmul.f32 %v1179, 1.442695
      %v1280 = vpow.pop %v1279
      %v1281 = vmul.f32 %v1180, 1.442695
      %v1282 = vpow.pop %v1281
      %v1283 = vmul.f32 %v1181, 1.442695
      %v1284 = vpow.pop %v1283
      %v1285 = vmul.f32 %v1182, 1.442695
      %v1286 = vpow.pop %v1285
      %v1287 = vmul.f32 %v1183, 1.442695
      %v1288 = vpow.pop %v1287
      %v1289 = vmul.f32 %v1184, 1.442695
      %v1290 = vpow.pop %v1289
      %v1291 = vmul.f32 %v1185, 1.442695
      %v1292 = vpow.pop %v1291
      %v1293 = vmul.f32 %v1186, 1.442695
      %v1294 = vpow.pop %v1293
      %v1295 = vmul.f32 %v1187, 1.442695
      %v1296 = vpow.pop %v1295
      %v1297 = vmul.f32 %v1188, 1.442695
      %v1298 = vpow.pop %v1297
      %v1299 = vmul.f32 %v1189, 1.442695
      %v1300 = vpow.pop %v1299
      %v1301 = vmul.f32 %v1190, 1.442695
      %v1302 = vpow.pop %v1301
      %v1303 = vmul.f32 %v1191, 1.442695
      %v1304 = vpow.pop %v1303
      %v1305 = vmul.f32 %v1192, 1.442695
      %v1306 = vpow.pop %v1305
      %v1307 = vmul.f32 %v1193, 1.442695
      %v1308 = vpow.pop %v1307
      %v1309 = vmul.f32 %v1194, 1.442695
      %v1310 = vpow.pop %v1309
      %v1311 = vmul.f32 %v1195, 1.442695
      %v1312 = vpow.pop %v1311
      %v1313 = vmul.f32 %v1196, 1.442695
      %v1314 = vpow.pop %v1313
      %v1315 = vmul.f32 %v1197, 1.442695
      %v1316 = vpow.pop %v1315
      %v1317 = vmul.f32 %v1198, 1.442695
      %v1318 = vpow.pop %v1317
      %v1319 = vmul.f32 %v1199, 1.442695
      %v1320 = vpow.pop %v1319
      %v1321 = vmul.f32 %v1200, 1.442695
      %v1322 = vpow.pop %v1321
      %v1323 = vmul.f32 %v1201, 1.442695
      %v1324 = vpow.pop %v1323
      %v1325 = vmul.f32 %v1202, 1.442695
      %v1326 = vpow.pop %v1325
      %v1327 = vmul.f32 %v1203, 1.442695
      %v1328 = vpow.pop %v1327
      %v1329 = vmul.f32 %v1204, 1.442695
      %v1330 = vpow.pop %v1329
      %v1331 = vmul.f32 %v1205, 1.442695
      %v1332 = vpow.pop %v1331
      %v1333 = vmul.f32 %v1206, 1.442695
      %v1334 = vpow.pop %v1333
      %v1335 = vmul.f32 %v1207, 1.442695
      %v1336 = vpow.pop %v1335
      %v1337 = vmul.f32 %v1208, 1.442695
      %v1338 = vpow.pop %v1337
      %v1339 = vmul.f32 %v1209, 1.442695
      %v1340 = vpow.pop %v1339
      %v1341 = vmul.f32 %v1210, 1.442695
      %v1342 = vpow.pop %v1341
      %v1343 = vmul.f32 %v1211, 1.442695
      %v1344 = vpow.pop %v1343
      %v1345 = vmul.f32 %v1212, 1.442695
      %v1346 = vpow.pop %v1345
      %v1347 = vmul.f32 %v1213, 1.442695
      %v1348 = vpow.pop %v1347
      %v1349 = vmul.f32 %v1214, 1.442695
      %v1350 = vpow.pop %v1349
      %v1351 = vmul.f32 %v1215, 1.442695
      %v1352 = vpow.pop %v1351
      %v1353 = vmul.f32 %v1216, 1.442695
      %v1354 = vpow.pop %v1353
      %v1355 = vmul.f32 %v1217, 1.442695
      %v1356 = vpow.pop %v1355
      %v1357 = vmul.f32 %v1218, 1.442695
      %v1358 = vpow.pop %v1357
      %v1359 = vmul.f32 %v1219, 1.442695
      %v1360 = vpow.pop %v1359
      %v1361 = vmul.f32 %v1220, 1.442695
      %v1362 = vpow.pop %v1361
      %v1363 = vmul.f32 %v1221, 1.442695
      %v1364 = vpow.pop %v1363
      %v1365 = vmul.f32 %v1222, 1.442695
      %v1366 = vpow.pop %v1365
      %v1367 = vmul.f32 %v1223, 1.442695
      %v1368 = vpow.pop %v1367
      %v1369 = vmul.f32 %v1224, 1.442695
      %v1370 = vpow.pop %v1369
      %v1371 = vmul.f32 %v1225, 1.442695
      %v1372 = vpow.pop %v1371
      %v1373 = vmul.f32 %v1226, 1.442695
      %v1374 = vpow.pop %v1373
      %v1375 = vmul.f32 %v1227, 1.442695
      %v1376 = vpow.pop %v1375
      %v1377 = vmul.f32 %v1228, 1.442695
      %v1378 = vpow.pop %v1377
      %v1379 = vmul.f32 %v1229, 1.442695
      %v1380 = vpow.pop %v1379
      %v1381 = vmul.f32 %v1230, 1.442695
      %v1382 = vpow.pop %v1381
      %v1383 = vmul.f32 %v1231, 1.442695
      %v1384 = vpow.pop %v1383
      %v1385 = vmul.f32 %v1232, 1.442695
      %v1386 = vpow.pop %v1385
      %v1387 = vmul.f32 %v1233, 1.442695
      %v1388 = vpow.pop %v1387
      %v1389 = vmul.f32 %v1234, 1.442695
      %v1390 = vpow.pop %v1389
      %v1391 = vmul.f32 %v1235, 1.442695
      %v1392 = vpow.pop %v1391
      %v1393 = vmul.f32 %v1236, 1.442695
      %v1394 = vpow.pop %v1393
      %v1395 = vmul.f32 %v1237, 1.442695
      %v1396 = vpow.pop %v1395
      %v1397 = vmul.f32 %v1238, 1.442695
      %v1398 = vpow.pop %v1397
      %v1399 = vmul.f32 %v1239, 1.442695
      %v1400 = vpow.pop %v1399
      %v1401 = vmul.f32 %v1240, 1.442695
      %v1402 = vpow.pop %v1401
      %v1403 = vmul.f32 %v1241, 1.442695
      %v1404 = vpow.pop %v1403
      %v1405 = vmul.f32 %v1242, 1.442695
      %v1406 = vpow.pop %v1405
      %v1407 = vmul.f32 %v1243, 1.442695
      %v1408 = vpow.pop %v1407
      %v1409 = vmul.f32 %v1244, 1.442695
      %v1410 = vpow.pop %v1409
      %v1411 = vmul.f32 %v1245, 1.442695
      %v1412 = vpow.pop %v1411
      %v1413 = vmul.f32 %v1246, 1.442695
      %v1414 = vpow.pop %v1413
      %v1415 = vadd.f32 %v1248, 1.0
      %v1416 = vadd.f32 %v1250, 1.0
      %v1417 = vadd.f32 %v1252, 1.0
      %v1418 = vadd.f32 %v1254, 1.0
      %v1419 = vadd.f32 %v1256, 1.0
      %v1420 = vadd.f32 %v1258, 1.0
      %v1421 = vadd.f32 %v1260, 1.0
      %v1422 = vadd.f32 %v1262, 1.0
      %v1423 = vadd.f32 %v1264, 1.0
      %v1424 = vadd.f32 %v1266, 1.0
      %v1425 = vadd.f32 %v1268, 1.0
      %v1426 = vadd.f32 %v1270, 1.0
      %v1427 = vadd.f32 %v1272, 1.0
      %v1428 = vadd.f32 %v1274, 1.0
      %v1429 = vadd.f32 %v1276, 1.0
      %v1430 = vadd.f32 %v1278, 1.0
      %v1431 = vadd.f32 %v1280, 1.0
      %v1432 = vadd.f32 %v1282, 1.0
      %v1433 = vadd.f32 %v1284, 1.0
      %v1434 = vadd.f32 %v1286, 1.0
      %v1435 = vadd.f32 %v1288, 1.0
      %v1436 = vadd.f32 %v1290, 1.0
      %v1437 = vadd.f32 %v1292, 1.0
      %v1438 = vadd.f32 %v1294, 1.0
      %v1439 = vadd.f32 %v1296, 1.0
      %v1440 = vadd.f32 %v1298, 1.0
      %v1441 = vadd.f32 %v1300, 1.0
      %v1442 = vadd.f32 %v1302, 1.0
      %v1443 = vadd.f32 %v1304, 1.0
      %v1444 = vadd.f32 %v1306, 1.0
      %v1445 = vadd.f32 %v1308, 1.0
      %v1446 = vadd.f32 %v1310, 1.0
      %v1447 = vadd.f32 %v1312, 1.0
      %v1448 = vadd.f32 %v1314, 1.0
      %v1449 = vadd.f32 %v1316, 1.0
      %v1450 = vadd.f32 %v1318, 1.0
      %v1451 = vadd.f32 %v1320, 1.0
      %v1452 = vadd.f32 %v1322, 1.0
      %v1453 = vadd.f32 %v1324, 1.0
      %v1454 = vadd.f32 %v1326, 1.0
      %v1455 = vadd.f32 %v1328, 1.0
      %v1456 = vadd.f32 %v1330, 1.0
      %v1457 = vadd.f32 %v1332, 1.0
      %v1458 = vadd.f32 %v1334, 1.0
      %v1459 = vadd.f32 %v1336, 1.0
      %v1460 = vadd.f32 %v1338, 1.0
      %v1461 = vadd.f32 %v1340, 1.0
      %v1462 = vadd.f32 %v1342, 1.0
      %v1463 = vadd.f32 %v1344, 1.0
      %v1464 = vadd.f32 %v1346, 1.0
      %v1465 = vadd.f32 %v1348, 1.0
      %v1466 = vadd.f32 %v1350, 1.0
      %v1467 = vadd.f32 %v1352, 1.0
      %v1468 = vadd.f32 %v1354, 1.0
      %v1469 = vadd.f32 %v1356, 1.0
      %v1470 = vadd.f32 %v1358, 1.0
      %v1471 = vadd.f32 %v1360, 1.0
      %v1472 = vadd.f32 %v1362, 1.0
      %v1473 = vadd.f32 %v1364, 1.0
      %v1474 = vadd.f32 %v1366, 1.0
      %v1475 = vadd.f32 %v1368, 1.0
      %v1476 = vadd.f32 %v1370, 1.0
      %v1477 = vadd.f32 %v1372, 1.0
      %v1478 = vadd.f32 %v1374, 1.0
      %v1479 = vadd.f32 %v1376, 1.0
      %v1480 = vadd.f32 %v1378, 1.0
      %v1481 = vadd.f32 %v1380, 1.0
      %v1482 = vadd.f32 %v1382, 1.0
      %v1483 = vadd.f32 %v1384, 1.0
      %v1484 = vadd.f32 %v1386, 1.0
      %v1485 = vadd.f32 %v1388, 1.0
      %v1486 = vadd.f32 %v1390, 1.0
      %v1487 = vadd.f32 %v1392, 1.0
      %v1488 = vadd.f32 %v1394, 1.0
      %v1489 = vadd.f32 %v1396, 1.0
      %v1490 = vadd.f32 %v1398, 1.0
      %v1491 = vadd.f32 %v1400, 1.0
      %v1492 = vadd.f32 %v1402, 1.0
      %v1493 = vadd.f32 %v1404, 1.0
      %v1494 = vadd.f32 %v1406, 1.0
      %v1495 = vadd.f32 %v1408, 1.0
      %v1496 = vadd.f32 %v1410, 1.0
      %v1497 = vadd.f32 %v1412, 1.0
      %v1498 = vadd.f32 %v1414, 1.0
      %v1499 = vrcp.pop %v1415
      %v1500 = vmul.f32 1.0, %v1499
      %v1501 = vrcp.pop %v1416
      %v1502 = vmul.f32 1.0, %v1501
      %v1503 = vrcp.pop %v1417
      %v1504 = vmul.f32 1.0, %v1503
      %v1505 = vrcp.pop %v1418
      %v1506 = vmul.f32 1.0, %v1505
      %v1507 = vrcp.pop %v1419
      %v1508 = vmul.f32 1.0, %v1507
      %v1509 = vrcp.pop %v1420
      %v1510 = vmul.f32 1.0, %v1509
      %v1511 = vrcp.pop %v1421
      %v1512 = vmul.f32 1.0, %v1511
      %v1513 = vrcp.pop %v1422
      %v1514 = vmul.f32 1.0, %v1513
      %v1515 = vrcp.pop %v1423
      %v1516 = vmul.f32 1.0, %v1515
      %v1517 = vrcp.pop %v1424
      %v1518 = vmul.f32 1.0, %v1517
      %v1519 = vrcp.pop %v1425
      %v1520 = vmul.f32 1.0, %v1519
      %v1521 = vrcp.pop %v1426
      %v1522 = vmul.f32 1.0, %v1521
      %v1523 = vrcp.pop %v1427
      %v1524 = vmul.f32 1.0, %v1523
      %v1525 = vrcp.pop %v1428
      %v1526 = vmul.f32 1.0, %v1525
      %v1527 = vrcp.pop %v1429
      %v1528 = vmul.f32 1.0, %v1527
      %v1529 = vrcp.pop %v1430
      %v1530 = vmul.f32 1.0, %v1529
      %v1531 = vrcp.pop %v1431
      %v1532 = vmul.f32 1.0, %v1531
      %v1533 = vrcp.pop %v1432
      %v1534 = vmul.f32 1.0, %v1533
      %v1535 = vrcp.pop %v1433
      %v1536 = vmul.f32 1.0, %v1535
      %v1537 = vrcp.pop %v1434
      %v1538 = vmul.f32 1.0, %v1537
      %v1539 = vrcp.pop %v1435
      %v1540 = vmul.f32 1.0, %v1539
      %v1541 = vrcp.pop %v1436
      %v1542 = vmul.f32 1.0, %v1541
      %v1543 = vrcp.pop %v1437
      %v1544 = vmul.f32 1.0, %v1543
      %v1545 = vrcp.pop %v1438
      %v1546 = vmul.f32 1.0, %v1545
      %v1547 = vrcp.pop %v1439
      %v1548 = vmul.f32 1.0, %v1547
      %v1549 = vrcp.pop %v1440
      %v1550 = vmul.f32 1.0, %v1549
      %v1551 = vrcp.pop %v1441
      %v1552 = vmul.f32 1.0, %v1551
      %v1553 = vrcp.pop %v1442
      %v1554 = vmul.f32 1.0, %v1553
      %v1555 = vrcp.pop %v1443
      %v1556 = vmul.f32 1.0, %v1555
      %v1557 = vrcp.pop %v1444
      %v1558 = vmul.f32 1.0, %v1557
      %v1559 = vrcp.pop %v1445
      %v1560 = vmul.f32 1.0, %v1559
      %v1561 = vrcp.pop %v1446
      %v1562 = vmul.f32 1.0, %v1561
      %v1563 = vrcp.pop %v1447
      %v1564 = vmul.f32 1.0, %v1563
      %v1565 = vrcp.pop %v1448
      %v1566 = vmul.f32 1.0, %v1565
      %v1567 = vrcp.pop %v1449
      %v1568 = vmul.f32 1.0, %v1567
      %v1569 = vrcp.pop %v1450
      %v1570 = vmul.f32 1.0, %v1569
      %v1571 = vrcp.pop %v1451
      %v1572 = vmul.f32 1.0, %v1571
      %v1573 = vrcp.pop %v1452
      %v1574 = vmul.f32 1.0, %v1573
      %v1575 = vrcp.pop %v1453
      %v1576 = vmul.f32 1.0, %v1575
      %v1577 = vrcp.pop %v1454
      %v1578 = vmul.f32 1.0, %v1577
      %v1579 = vrcp.pop %v1455
      %v1580 = vmul.f32 1.0, %v1579
      %v1581 = vrcp.pop %v1456
      %v1582 = vmul.f32 1.0, %v1581
      %v1583 = vrcp.pop %v1457
      %v1584 = vmul.f32 1.0, %v1583
      %v1585 = vrcp.pop %v1458
      %v1586 = vmul.f32 1.0, %v1585
      %v1587 = vrcp.pop %v1459
      %v1588 = vmul.f32 1.0, %v1587
      %v1589 = vrcp.pop %v1460
      %v1590 = vmul.f32 1.0, %v1589
      %v1591 = vrcp.pop %v1461
      %v1592 = vmul.f32 1.0, %v1591
      %v1593 = vrcp.pop %v1462
      %v1594 = vmul.f32 1.0, %v1593
      %v1595 = vrcp.pop %v1463
      %v1596 = vmul.f32 1.0, %v1595
      %v1597 = vrcp.pop %v1464
      %v1598 = vmul.f32 1.0, %v1597
      %v1599 = vrcp.pop %v1465
      %v1600 = vmul.f32 1.0, %v1599
      %v1601 = vrcp.pop %v1466
      %v1602 = vmul.f32 1.0, %v1601
      %v1603 = vrcp.pop %v1467
      %v1604 = vmul.f32 1.0, %v1603
      %v1605 = vrcp.pop %v1468
      %v1606 = vmul.f32 1.0, %v1605
      %v1607 = vrcp.pop %v1469
      %v1608 = vmul.f32 1.0, %v1607
      %v1609 = vrcp.pop %v1470
      %v1610 = vmul.f32 1.0, %v1609
      %v1611 = vrcp.pop %v1471
      %v1612 = vmul.f32 1.0, %v1611
      %v1613 = vrcp.pop %v1472
      %v1614 = vmul.f32 1.0, %v1613
      %v1615 = vrcp.pop %v1473
      %v1616 = vmul.f32 1.0, %v1615
      %v1617 = vrcp.pop %v1474
      %v1618 = vmul.f32 1.0, %v1617
      %v1619 = vrcp.pop %v1475
      %v1620 = vmul.f32 1.0, %v1619
      %v1621 = vrcp.pop %v1476
      %v1622 = vmul.f32 1.0, %v1621
      %v1623 = vrcp.pop %v1477
      %v1624 = vmul.f32 1.0, %v1623
      %v1625 = vrcp.pop %v1478
      %v1626 = vmul.f32 1.0, %v1625
      %v1627 = vrcp.pop %v1479
      %v1628 = vmul.f32 1.0, %v1627
      %v1629 = vrcp.pop %v1480
      %v1630 = vmul.f32 1.0, %v1629
      %v1631 = vrcp.pop %v1481
      %v1632 = vmul.f32 1.0, %v1631
      %v1633 = vrcp.pop %v1482
      %v1634 = vmul.f32 1.0, %v1633
      %v1635 = vrcp.pop %v1483
      %v1636 = vmul.f32 1.0, %v1635
      %v1637 = vrcp.pop %v1484
      %v1638 = vmul.f32 1.0, %v1637
      %v1639 = vrcp.pop %v1485
      %v1640 = vmul.f32 1.0, %v1639
      %v1641 = vrcp.pop %v1486
      %v1642 = vmul.f32 1.0, %v1641
      %v1643 = vrcp.pop %v1487
      %v1644 = vmul.f32 1.0, %v1643
      %v1645 = vrcp.pop %v1488
      %v1646 = vmul.f32 1.0, %v1645
      %v1647 = vrcp.pop %v1489
      %v1648 = vmul.f32 1.0, %v1647
      %v1649 = vrcp.pop %v1490
      %v1650 = vmul.f32 1.0, %v1649
      %v1651 = vrcp.pop %v1491
      %v1652 = vmul.f32 1.0, %v1651
      %v1653 = vrcp.pop %v1492
      %v1654 = vmul.f32 1.0, %v1653
      %v1655 = vrcp.pop %v1493
      %v1656 = vmul.f32 1.0, %v1655
      %v1657 = vrcp.pop %v1494
      %v1658 = vmul.f32 1.0, %v1657
      %v1659 = vrcp.pop %v1495
      %v1660 = vmul.f32 1.0, %v1659
      %v1661 = vrcp.pop %v1496
      %v1662 = vmul.f32 1.0, %v1661
      %v1663 = vrcp.pop %v1497
      %v1664 = vmul.f32 1.0, %v1663
      %v1665 = vrcp.pop %v1498
      %v1666 = vmul.f32 1.0, %v1665
      %v1667 = vld [vmem:[%s241] sm:$0xff]
      %v1668 = vld [vmem:[%s241 + $0x8] sm:$0xff]
      %v1669 = vld [vmem:[%s241 + $0x10] sm:$0xff]
      %v1670 = vld [vmem:[%s241 + $0x18] sm:$0xff]
      %v1671 = vld [vmem:[%s241 + $0x20] sm:$0xff]
      %v1672 = vld [vmem:[%s241 + $0x28] sm:$0xff]
      %v1673 = vld [vmem:[%s241 + $0x30] sm:$0xff]
      %v1674 = vld [vmem:[%s241 + $0x38] sm:$0xff]
      %v1675 = vld [vmem:[%s241 + $0x40] sm:$0xff]
      %v1676 = vld [vmem:[%s241 + $0x48] sm:$0xff]
      %v1677 = vld [vmem:[%s241 + $0x50] sm:$0xff]
      %v1678 = vld [vmem:[%s241 + $0x58] sm:$0xff]
      %v1679 = vld [vmem:[%s241 + $0x60] sm:$0xff]
      %v1680 = vld [vmem:[%s241 + $0x68] sm:$0xff]
      %v1681 = vld [vmem:[%s241 + $0x70] sm:$0xff]
      %v1682 = vld [vmem:[%s241 + $0x78] sm:$0xff]
      %v1683 = vld [vmem:[%s241 + $0x80] sm:$0xff]
      %v1684 = vld [vmem:[%s241 + $0x88] sm:$0xff]
      %v1685 = vld [vmem:[%s241 + $0x90] sm:$0xff]
      %v1686 = vld [vmem:[%s241 + $0x98] sm:$0xff]
      %v1687 = vld [vmem:[%s241 + $0xa0] sm:$0xff]
      %v1688 = vld [vmem:[%s241 + $0xa8] sm:$0xff]
      %v1689 = vld [vmem:[%s241 + $0xb0] sm:$0xff]
      %v1690 = vld [vmem:[%s241 + $0xb8] sm:$0xff]
      %v1691 = vld [vmem:[%s241 + $0xc0] sm:$0xff]
      %v1692 = vld [vmem:[%s241 + $0xc8] sm:$0xff]
      %v1693 = vld [vmem:[%s241 + $0xd0] sm:$0xff]
      %v1694 = vld [vmem:[%s241 + $0xd8] sm:$0xff]
      %v1695 = vld [vmem:[%s241 + $0xe0] sm:$0xff]
      %v1696 = vld [vmem:[%s241 + $0xe8] sm:$0xff]
      %v1697 = vld [vmem:[%s241 + $0xf0] sm:$0xff]
      %v1698 = vld [vmem:[%s241 + $0xf8] sm:$0xff]
      %v1699 = vld [vmem:[%s241 + $0x100] sm:$0xff]
      %v1700 = vld [vmem:[%s241 + $0x108] sm:$0xff]
      %v1701 = vld [vmem:[%s241 + $0x110] sm:$0xff]
      %v1702 = vld [vmem:[%s241 + $0x118] sm:$0xff]
      %v1703 = vld [vmem:[%s241 + $0x120] sm:$0xff]
      %v1704 = vld [vmem:[%s241 + $0x128] sm:$0xff]
      %v1705 = vld [vmem:[%s241 + $0x130] sm:$0xff]
      %v1706 = vld [vmem:[%s241 + $0x138] sm:$0xff]
      %v1707 = vld [vmem:[%s241 + $0x140] sm:$0xff]
      %v1708 = vld [vmem:[%s241 + $0x148] sm:$0xff]
      %v1709 = vld [vmem:[%s241 + $0x150] sm:$0xff]
      %v1710 = vld [vmem:[%s241 + $0x158] sm:$0xff]
      %v1711 = vld [vmem:[%s241 + $0x160] sm:$0xff]
      %v1712 = vld [vmem:[%s241 + $0x168] sm:$0xff]
      %v1713 = vld [vmem:[%s241 + $0x170] sm:$0xff]
      %v1714 = vld [vmem:[%s241 + $0x178] sm:$0xff]
      %v1715 = vld [vmem:[%s241 + $0x180] sm:$0xff]
      %v1716 = vld [vmem:[%s241 + $0x188] sm:$0xff]
      %v1717 = vld [vmem:[%s241 + $0x190] sm:$0xff]
      %v1718 = vld [vmem:[%s241 + $0x198] sm:$0xff]
      %v1719 = vld [vmem:[%s241 + $0x1a0] sm:$0xff]
      %v1720 = vld [vmem:[%s241 + $0x1a8] sm:$0xff]
      %v1721 = vld [vmem:[%s241 + $0x1b0] sm:$0xff]
      %v1722 = vld [vmem:[%s241 + $0x1b8] sm:$0xff]
      %v1723 = vld [vmem:[%s241 + $0x1c0] sm:$0xff]
      %v1724 = vld [vmem:[%s241 + $0x1c8] sm:$0xff]
      %v1725 = vld [vmem:[%s241 + $0x1d0] sm:$0xff]
      %v1726 = vld [vmem:[%s241 + $0x1d8] sm:$0xff]
      %v1727 = vld [vmem:[%s241 + $0x1e0] sm:$0xff]
      %v1728 = vld [vmem:[%s241 + $0x1e8] sm:$0xff]
      %v1729 = vld [vmem:[%s241 + $0x1f0] sm:$0xff]
      %v1730 = vld [vmem:[%s241 + $0x1f8] sm:$0xff]
      %v1731 = vld [vmem:[%s241 + $0x200] sm:$0xff]
      %v1732 = vld [vmem:[%s241 + $0x208] sm:$0xff]
      %v1733 = vld [vmem:[%s241 + $0x210] sm:$0xff]
      %v1734 = vld [vmem:[%s241 + $0x218] sm:$0xff]
      %v1735 = vld [vmem:[%s241 + $0x220] sm:$0xff]
      %v1736 = vld [vmem:[%s241 + $0x228] sm:$0xff]
      %v1737 = vld [vmem:[%s241 + $0x230] sm:$0xff]
      %v1738 = vld [vmem:[%s241 + $0x238] sm:$0xff]
      %v1739 = vld [vmem:[%s241 + $0x240] sm:$0xff]
      %v1740 = vld [vmem:[%s241 + $0x248] sm:$0xff]
      %v1741 = vld [vmem:[%s241 + $0x250] sm:$0xff]
      %v1742 = vld [vmem:[%s241 + $0x258] sm:$0xff]
      %v1743 = vld [vmem:[%s241 + $0x260] sm:$0xff]
      %v1744 = vld [vmem:[%s241 + $0x268] sm:$0xff]
      %v1745 = vld [vmem:[%s241 + $0x270] sm:$0xff]
      %v1746 = vld [vmem:[%s241 + $0x278] sm:$0xff]
      %v1747 = vld [vmem:[%s241 + $0x280] sm:$0xff]
      %v1748 = vld [vmem:[%s241 + $0x288] sm:$0xff]
      %v1749 = vld [vmem:[%s241 + $0x290] sm:$0xff]
      %v1750 = vld [vmem:[%s241 + $0x298] sm:$0xff]
      %v1751 = vld [vmem:[%s241 + $0x2a0] sm:$0xff]
      %v1752 = vld [vmem:[%s241 + $0x2a8] sm:$0xff]
      %v1753 = vld [vmem:[%s241 + $0x2b0] sm:$0xff]
      %v1754 = vld [vmem:[%s241 + $0x2b8] sm:$0xff]
      %v1755 = vld [vmem:[%s241 + $0x2c0] sm:$0xff]
      %v1756 = vld [vmem:[%s241 + $0x2c8] sm:$0xff]
      %v1757 = vld [vmem:[%s241 + $0x2d0] sm:$0xff]
      %v1758 = vld [vmem:[%s241 + $0x2d8] sm:$0xff]
      %v1759 = vld [vmem:[%s241 + $0x2e0] sm:$0xff]
      %v1760 = vld [vmem:[%s241 + $0x2e8] sm:$0xff]
      %v1761 = vld [vmem:[%s241 + $0x2f0] sm:$0xff]
      %v1762 = vld [vmem:[%s241 + $0x2f8] sm:$0xff]
      %v1763 = vld [vmem:[%s241 + $0x300] sm:$0xff]
      %v1764 = vld [vmem:[%s241 + $0x308] sm:$0xff]
      %v1765 = vld [vmem:[%s241 + $0x310] sm:$0xff]
      %v1766 = vld [vmem:[%s241 + $0x318] sm:$0xff]
      %v1767 = vld [vmem:[%s241 + $0x320] sm:$0xff]
      %v1768 = vld [vmem:[%s241 + $0x328] sm:$0xff]
      %v1769 = vld [vmem:[%s241 + $0x330] sm:$0xff]
      %v1770 = vld [vmem:[%s241 + $0x338] sm:$0xff]
      %v1771 = vld [vmem:[%s241 + $0x340] sm:$0xff]
      %v1772 = vld [vmem:[%s241 + $0x348] sm:$0xff]
      %v1773 = vld [vmem:[%s241 + $0x350] sm:$0xff]
      %v1774 = vld [vmem:[%s241 + $0x358] sm:$0xff]
      %v1775 = vld [vmem:[%s241 + $0x360] sm:$0xff]
      %v1776 = vld [vmem:[%s241 + $0x368] sm:$0xff]
      %v1777 = vld [vmem:[%s241 + $0x370] sm:$0xff]
      %v1778 = vld [vmem:[%s241 + $0x378] sm:$0xff]
      %v1779 = vld [vmem:[%s241 + $0x380] sm:$0xff]
      %v1780 = vld [vmem:[%s241 + $0x388] sm:$0xff]
      %v1781 = vld [vmem:[%s241 + $0x390] sm:$0xff]
      %v1782 = vld [vmem:[%s241 + $0x398] sm:$0xff]
      %v1783 = vld [vmem:[%s241 + $0x3a0] sm:$0xff]
      %v1784 = vld [vmem:[%s241 + $0x3a8] sm:$0xff]
      %v1785 = vld [vmem:[%s241 + $0x3b0] sm:$0xff]
      %v1786 = vld [vmem:[%s241 + $0x3b8] sm:$0xff]
      %v1787 = vld [vmem:[%s241 + $0x3c0] sm:$0xff]
      %v1788 = vld [vmem:[%s241 + $0x3c8] sm:$0xff]
      %v1789 = vld [vmem:[%s241 + $0x3d0] sm:$0xff]
      %v1790 = vld [vmem:[%s241 + $0x3d8] sm:$0xff]
      %v1791 = vld [vmem:[%s241 + $0x3e0] sm:$0xff]
      %v1792 = vld [vmem:[%s241 + $0x3e8] sm:$0xff]
      %v1793 = vld [vmem:[%s241 + $0x3f0] sm:$0xff]
      %v1794 = vld [vmem:[%s241 + $0x3f8] sm:$0xff]
      %v1795 = vld [vmem:[%s241 + $0x400] sm:$0xff]
      %v1796 = vld [vmem:[%s241 + $0x408] sm:$0xff]
      %v1797 = vld [vmem:[%s241 + $0x410] sm:$0xff]
      %v1798 = vld [vmem:[%s241 + $0x418] sm:$0xff]
      %v1799 = vld [vmem:[%s241 + $0x420] sm:$0xff]
      %v1800 = vld [vmem:[%s241 + $0x428] sm:$0xff]
      %v1801 = vld [vmem:[%s241 + $0x430] sm:$0xff]
      %v1802 = vld [vmem:[%s241 + $0x438] sm:$0xff]
      %v1803 = vld [vmem:[%s241 + $0x440] sm:$0xff]
      %v1804 = vld [vmem:[%s241 + $0x448] sm:$0xff]
      %v1805 = vld [vmem:[%s241 + $0x450] sm:$0xff]
      %v1806 = vld [vmem:[%s241 + $0x458] sm:$0xff]
      %v1807 = vld [vmem:[%s241 + $0x460] sm:$0xff]
      %v1808 = vld [vmem:[%s241 + $0x468] sm:$0xff]
      %v1809 = vld [vmem:[%s241 + $0x470] sm:$0xff]
      %v1810 = vld [vmem:[%s241 + $0x478] sm:$0xff]
      %v1811 = vld [vmem:[%s241 + $0x480] sm:$0xff]
      %v1812 = vld [vmem:[%s241 + $0x488] sm:$0xff]
      %v1813 = vld [vmem:[%s241 + $0x490] sm:$0xff]
      %v1814 = vld [vmem:[%s241 + $0x498] sm:$0xff]
      %v1815 = vld [vmem:[%s241 + $0x4a0] sm:$0xff]
      %v1816 = vld [vmem:[%s241 + $0x4a8] sm:$0xff]
      %v1817 = vld [vmem:[%s241 + $0x4b0] sm:$0xff]
      %v1818 = vld [vmem:[%s241 + $0x4b8] sm:$0xff]
      %v1819 = vld [vmem:[%s241 + $0x4c0] sm:$0xff]
      %v1820 = vld [vmem:[%s241 + $0x4c8] sm:$0xff]
      %v1821 = vld [vmem:[%s241 + $0x4d0] sm:$0xff]
      %v1822 = vld [vmem:[%s241 + $0x4d8] sm:$0xff]
      %v1823 = vld [vmem:[%s241 + $0x4e0] sm:$0xff]
      %v1824 = vld [vmem:[%s241 + $0x4e8] sm:$0xff]
      %v1825 = vld [vmem:[%s241 + $0x4f0] sm:$0xff]
      %v1826 = vld [vmem:[%s241 + $0x4f8] sm:$0xff]
      %v1827 = vld [vmem:[%s241 + $0x500] sm:$0xff]
      %v1828 = vld [vmem:[%s241 + $0x508] sm:$0xff]
      %v1829 = vld [vmem:[%s241 + $0x510] sm:$0xff]
      %v1830 = vld [vmem:[%s241 + $0x518] sm:$0xff]
      %v1831 = vld [vmem:[%s241 + $0x520] sm:$0xff]
      %v1832 = vld [vmem:[%s241 + $0x528] sm:$0xff]
      %v1833 = vld [vmem:[%s241 + $0x530] sm:$0xff]
      %v1834 = vld [vmem:[%s241 + $0x538] sm:$0xff]
      %1836 = vset.pattern.permute.xlu0 0
      %1837 = vperm.xlu0 %1836, %v1500
      %v1838 = vpop.permute.xlu0 %1837
      %1841 = vset.pattern.permute.xlu0 0
      %1842 = vperm.xlu0 %1841, %v1502
      %v1843 = vpop.permute.xlu0 %1842
      %1846 = vset.pattern.permute.xlu0 0
      %1847 = vperm.xlu0 %1846, %v1504
      %v1848 = vpop.permute.xlu0 %1847
      %1851 = vset.pattern.permute.xlu0 0
      %1852 = vperm.xlu0 %1851, %v1506
      %v1853 = vpop.permute.xlu0 %1852
      %1856 = vset.pattern.permute.xlu0 0
      %1857 = vperm.xlu0 %1856, %v1508
      %v1858 = vpop.permute.xlu0 %1857
      %1861 = vset.pattern.permute.xlu0 0
      %1862 = vperm.xlu0 %1861, %v1510
      %v1863 = vpop.permute.xlu0 %1862
      %1866 = vset.pattern.permute.xlu0 0
      %1867 = vperm.xlu0 %1866, %v1512
      %v1868 = vpop.permute.xlu0 %1867
      %1871 = vset.pattern.permute.xlu0 0
      %1872 = vperm.xlu0 %1871, %v1514
      %v1873 = vpop.permute.xlu0 %1872
      %1876 = vset.pattern.permute.xlu0 0
      %1877 = vperm.xlu0 %1876, %v1516
      %v1878 = vpop.permute.xlu0 %1877
      %1881 = vset.pattern.permute.xlu0 0
      %1882 = vperm.xlu0 %1881, %v1518
      %v1883 = vpop.permute.xlu0 %1882
      %1886 = vset.pattern.permute.xlu0 0
      %1887 = vperm.xlu0 %1886, %v1520
      %v1888 = vpop.permute.xlu0 %1887
      %1891 = vset.pattern.permute.xlu0 0
      %1892 = vperm.xlu0 %1891, %v1522
      %v1893 = vpop.permute.xlu0 %1892
      %1896 = vset.pattern.permute.xlu0 0
      %1897 = vperm.xlu0 %1896, %v1524
      %v1898 = vpop.permute.xlu0 %1897
      %1901 = vset.pattern.permute.xlu0 0
      %1902 = vperm.xlu0 %1901, %v1526
      %v1903 = vpop.permute.xlu0 %1902
      %1906 = vset.pattern.permute.xlu0 0
      %1907 = vperm.xlu0 %1906, %v1528
      %v1908 = vpop.permute.xlu0 %1907
      %1911 = vset.pattern.permute.xlu0 0
      %1912 = vperm.xlu0 %1911, %v1530
      %v1913 = vpop.permute.xlu0 %1912
      %1916 = vset.pattern.permute.xlu0 0
      %1917 = vperm.xlu0 %1916, %v1532
      %v1918 = vpop.permute.xlu0 %1917
      %1921 = vset.pattern.permute.xlu0 0
      %1922 = vperm.xlu0 %1921, %v1534
      %v1923 = vpop.permute.xlu0 %1922
      %1926 = vset.pattern.permute.xlu0 0
      %1927 = vperm.xlu0 %1926, %v1536
      %v1928 = vpop.permute.xlu0 %1927
      %1931 = vset.pattern.permute.xlu0 0
      %1932 = vperm.xlu0 %1931, %v1538
      %v1933 = vpop.permute.xlu0 %1932
      %1936 = vset.pattern.permute.xlu0 0
      %1937 = vperm.xlu0 %1936, %v1540
      %v1938 = vpop.permute.xlu0 %1937
      %1941 = vset.pattern.permute.xlu0 0
      %1942 = vperm.xlu0 %1941, %v1542
      %v1943 = vpop.permute.xlu0 %1942
      %1946 = vset.pattern.permute.xlu0 0
      %1947 = vperm.xlu0 %1946, %v1544
      %v1948 = vpop.permute.xlu0 %1947
      %1951 = vset.pattern.permute.xlu0 0
      %1952 = vperm.xlu0 %1951, %v1546
      %v1953 = vpop.permute.xlu0 %1952
      %1956 = vset.pattern.permute.xlu0 0
      %1957 = vperm.xlu0 %1956, %v1548
      %v1958 = vpop.permute.xlu0 %1957
      %1961 = vset.pattern.permute.xlu0 0
      %1962 = vperm.xlu0 %1961, %v1550
      %v1963 = vpop.permute.xlu0 %1962
      %1966 = vset.pattern.permute.xlu0 0
      %1967 = vperm.xlu0 %1966, %v1552
      %v1968 = vpop.permute.xlu0 %1967
      %1971 = vset.pattern.permute.xlu0 0
      %1972 = vperm.xlu0 %1971, %v1554
      %v1973 = vpop.permute.xlu0 %1972
      %1976 = vset.pattern.permute.xlu0 0
      %1977 = vperm.xlu0 %1976, %v1556
      %v1978 = vpop.permute.xlu0 %1977
      %1981 = vset.pattern.permute.xlu0 0
      %1982 = vperm.xlu0 %1981, %v1558
      %v1983 = vpop.permute.xlu0 %1982
      %1986 = vset.pattern.permute.xlu0 0
      %1987 = vperm.xlu0 %1986, %v1560
      %v1988 = vpop.permute.xlu0 %1987
      %1991 = vset.pattern.permute.xlu0 0
      %1992 = vperm.xlu0 %1991, %v1562
      %v1993 = vpop.permute.xlu0 %1992
      %1996 = vset.pattern.permute.xlu0 0
      %1997 = vperm.xlu0 %1996, %v1564
      %v1998 = vpop.permute.xlu0 %1997
      %2001 = vset.pattern.permute.xlu0 0
      %2002 = vperm.xlu0 %2001, %v1566
      %v2003 = vpop.permute.xlu0 %2002
      %2006 = vset.pattern.permute.xlu0 0
      %2007 = vperm.xlu0 %2006, %v1568
      %v2008 = vpop.permute.xlu0 %2007
      %2011 = vset.pattern.permute.xlu0 0
      %2012 = vperm.xlu0 %2011, %v1570
      %v2013 = vpop.permute.xlu0 %2012
      %2016 = vset.pattern.permute.xlu0 0
      %2017 = vperm.xlu0 %2016, %v1572
      %v2018 = vpop.permute.xlu0 %2017
      %2021 = vset.pattern.permute.xlu0 0
      %2022 = vperm.xlu0 %2021, %v1574
      %v2023 = vpop.permute.xlu0 %2022
      %2026 = vset.pattern.permute.xlu0 0
      %2027 = vperm.xlu0 %2026, %v1576
      %v2028 = vpop.permute.xlu0 %2027
      %2031 = vset.pattern.permute.xlu0 0
      %2032 = vperm.xlu0 %2031, %v1578
      %v2033 = vpop.permute.xlu0 %2032
      %2036 = vset.pattern.permute.xlu0 0
      %2037 = vperm.xlu0 %2036, %v1580
      %v2038 = vpop.permute.xlu0 %2037
      %2041 = vset.pattern.permute.xlu0 0
      %2042 = vperm.xlu0 %2041, %v1582
      %v2043 = vpop.permute.xlu0 %2042
      %2046 = vset.pattern.permute.xlu0 0
      %2047 = vperm.xlu0 %2046, %v1584
      %v2048 = vpop.permute.xlu0 %2047
      %2051 = vset.pattern.permute.xlu0 0
      %2052 = vperm.xlu0 %2051, %v1586
      %v2053 = vpop.permute.xlu0 %2052
      %2056 = vset.pattern.permute.xlu0 0
      %2057 = vperm.xlu0 %2056, %v1588
      %v2058 = vpop.permute.xlu0 %2057
      %2061 = vset.pattern.permute.xlu0 0
      %2062 = vperm.xlu0 %2061, %v1590
      %v2063 = vpop.permute.xlu0 %2062
      %2066 = vset.pattern.permute.xlu0 0
      %2067 = vperm.xlu0 %2066, %v1592
      %v2068 = vpop.permute.xlu0 %2067
      %2071 = vset.pattern.permute.xlu0 0
      %2072 = vperm.xlu0 %2071, %v1594
      %v2073 = vpop.permute.xlu0 %2072
      %2076 = vset.pattern.permute.xlu0 0
      %2077 = vperm.xlu0 %2076, %v1596
      %v2078 = vpop.permute.xlu0 %2077
      %2081 = vset.pattern.permute.xlu0 0
      %2082 = vperm.xlu0 %2081, %v1598
      %v2083 = vpop.permute.xlu0 %2082
      %2086 = vset.pattern.permute.xlu0 0
      %2087 = vperm.xlu0 %2086, %v1600
      %v2088 = vpop.permute.xlu0 %2087
      %2091 = vset.pattern.permute.xlu0 0
      %2092 = vperm.xlu0 %2091, %v1602
      %v2093 = vpop.permute.xlu0 %2092
      %2096 = vset.pattern.permute.xlu0 0
      %2097 = vperm.xlu0 %2096, %v1604
      %v2098 = vpop.permute.xlu0 %2097
      %2101 = vset.pattern.permute.xlu0 0
      %2102 = vperm.xlu0 %2101, %v1606
      %v2103 = vpop.permute.xlu0 %2102
      %2106 = vset.pattern.permute.xlu0 0
      %2107 = vperm.xlu0 %2106, %v1608
      %v2108 = vpop.permute.xlu0 %2107
      %2111 = vset.pattern.permute.xlu0 0
      %2112 = vperm.xlu0 %2111, %v1610
      %v2113 = vpop.permute.xlu0 %2112
      %2116 = vset.pattern.permute.xlu0 0
      %2117 = vperm.xlu0 %2116, %v1612
      %v2118 = vpop.permute.xlu0 %2117
      %2121 = vset.pattern.permute.xlu0 0
      %2122 = vperm.xlu0 %2121, %v1614
      %v2123 = vpop.permute.xlu0 %2122
      %2126 = vset.pattern.permute.xlu0 0
      %2127 = vperm.xlu0 %2126, %v1616
      %v2128 = vpop.permute.xlu0 %2127
      %2131 = vset.pattern.permute.xlu0 0
      %2132 = vperm.xlu0 %2131, %v1618
      %v2133 = vpop.permute.xlu0 %2132
      %2136 = vset.pattern.permute.xlu0 0
      %2137 = vperm.xlu0 %2136, %v1620
      %v2138 = vpop.permute.xlu0 %2137
      %2141 = vset.pattern.permute.xlu0 0
      %2142 = vperm.xlu0 %2141, %v1622
      %v2143 = vpop.permute.xlu0 %2142
      %2146 = vset.pattern.permute.xlu0 0
      %2147 = vperm.xlu0 %2146, %v1624
      %v2148 = vpop.permute.xlu0 %2147
      %2151 = vset.pattern.permute.xlu0 0
      %2152 = vperm.xlu0 %2151, %v1626
      %v2153 = vpop.permute.xlu0 %2152
      %2156 = vset.pattern.permute.xlu0 0
      %2157 = vperm.xlu0 %2156, %v1628
      %v2158 = vpop.permute.xlu0 %2157
      %2161 = vset.pattern.permute.xlu0 0
      %2162 = vperm.xlu0 %2161, %v1630
      %v2163 = vpop.permute.xlu0 %2162
      %2166 = vset.pattern.permute.xlu0 0
      %2167 = vperm.xlu0 %2166, %v1632
      %v2168 = vpop.permute.xlu0 %2167
      %2171 = vset.pattern.permute.xlu0 0
      %2172 = vperm.xlu0 %2171, %v1634
      %v2173 = vpop.permute.xlu0 %2172
      %2176 = vset.pattern.permute.xlu0 0
      %2177 = vperm.xlu0 %2176, %v1636
      %v2178 = vpop.permute.xlu0 %2177
      %2181 = vset.pattern.permute.xlu0 0
      %2182 = vperm.xlu0 %2181, %v1638
      %v2183 = vpop.permute.xlu0 %2182
      %2186 = vset.pattern.permute.xlu0 0
      %2187 = vperm.xlu0 %2186, %v1640
      %v2188 = vpop.permute.xlu0 %2187
      %2191 = vset.pattern.permute.xlu0 0
      %2192 = vperm.xlu0 %2191, %v1642
      %v2193 = vpop.permute.xlu0 %2192
      %2196 = vset.pattern.permute.xlu0 0
      %2197 = vperm.xlu0 %2196, %v1644
      %v2198 = vpop.permute.xlu0 %2197
      %2201 = vset.pattern.permute.xlu0 0
      %2202 = vperm.xlu0 %2201, %v1646
      %v2203 = vpop.permute.xlu0 %2202
      %2206 = vset.pattern.permute.xlu0 0
      %2207 = vperm.xlu0 %2206, %v1648
      %v2208 = vpop.permute.xlu0 %2207
      %2211 = vset.pattern.permute.xlu0 0
      %2212 = vperm.xlu0 %2211, %v1650
      %v2213 = vpop.permute.xlu0 %2212
      %2216 = vset.pattern.permute.xlu0 0
      %2217 = vperm.xlu0 %2216, %v1652
      %v2218 = vpop.permute.xlu0 %2217
      %2221 = vset.pattern.permute.xlu0 0
      %2222 = vperm.xlu0 %2221, %v1654
      %v2223 = vpop.permute.xlu0 %2222
      %2226 = vset.pattern.permute.xlu0 0
      %2227 = vperm.xlu0 %2226, %v1656
      %v2228 = vpop.permute.xlu0 %2227
      %2231 = vset.pattern.permute.xlu0 0
      %2232 = vperm.xlu0 %2231, %v1658
      %v2233 = vpop.permute.xlu0 %2232
      %2236 = vset.pattern.permute.xlu0 0
      %2237 = vperm.xlu0 %2236, %v1660
      %v2238 = vpop.permute.xlu0 %2237
      %2241 = vset.pattern.permute.xlu0 0
      %2242 = vperm.xlu0 %2241, %v1662
      %v2243 = vpop.permute.xlu0 %2242
      %2246 = vset.pattern.permute.xlu0 0
      %2247 = vperm.xlu0 %2246, %v1664
      %v2248 = vpop.permute.xlu0 %2247
      %2251 = vset.pattern.permute.xlu0 0
      %2252 = vperm.xlu0 %2251, %v1666
      %v2253 = vpop.permute.xlu0 %2252
      %v2255 = vmul.f32 %v1838, %v1667
      %v2256 = vmul.f32 %v1838, %v1668
      %v2257 = vmul.f32 %v1843, %v1669
      %v2258 = vmul.f32 %v1843, %v1670
      %v2259 = vmul.f32 %v1848, %v1671
      %v2260 = vmul.f32 %v1848, %v1672
      %v2261 = vmul.f32 %v1853, %v1673
      %v2262 = vmul.f32 %v1853, %v1674
      %v2263 = vmul.f32 %v1858, %v1675
      %v2264 = vmul.f32 %v1858, %v1676
      %v2265 = vmul.f32 %v1863, %v1677
      %v2266 = vmul.f32 %v1863, %v1678
      %v2267 = vmul.f32 %v1868, %v1679
      %v2268 = vmul.f32 %v1868, %v1680
      %v2269 = vmul.f32 %v1873, %v1681
      %v2270 = vmul.f32 %v1873, %v1682
      %v2271 = vmul.f32 %v1878, %v1683
      %v2272 = vmul.f32 %v1878, %v1684
      %v2273 = vmul.f32 %v1883, %v1685
      %v2274 = vmul.f32 %v1883, %v1686
      %v2275 = vmul.f32 %v1888, %v1687
      %v2276 = vmul.f32 %v1888, %v1688
      %v2277 = vmul.f32 %v1893, %v1689
      %v2278 = vmul.f32 %v1893, %v1690
      %v2279 = vmul.f32 %v1898, %v1691
      %v2280 = vmul.f32 %v1898, %v1692
      %v2281 = vmul.f32 %v1903, %v1693
      %v2282 = vmul.f32 %v1903, %v1694
      %v2283 = vmul.f32 %v1908, %v1695
      %v2284 = vmul.f32 %v1908, %v1696
      %v2285 = vmul.f32 %v1913, %v1697
      %v2286 = vmul.f32 %v1913, %v1698
      %v2287 = vmul.f32 %v1918, %v1699
      %v2288 = vmul.f32 %v1918, %v1700
      %v2289 = vmul.f32 %v1923, %v1701
      %v2290 = vmul.f32 %v1923, %v1702
      %v2291 = vmul.f32 %v1928, %v1703
      %v2292 = vmul.f32 %v1928, %v1704
      %v2293 = vmul.f32 %v1933, %v1705
      %v2294 = vmul.f32 %v1933, %v1706
      %v2295 = vmul.f32 %v1938, %v1707
      %v2296 = vmul.f32 %v1938, %v1708
      %v2297 = vmul.f32 %v1943, %v1709
      %v2298 = vmul.f32 %v1943, %v1710
      %v2299 = vmul.f32 %v1948, %v1711
      %v2300 = vmul.f32 %v1948, %v1712
      %v2301 = vmul.f32 %v1953, %v1713
      %v2302 = vmul.f32 %v1953, %v1714
      %v2303 = vmul.f32 %v1958, %v1715
      %v2304 = vmul.f32 %v1958, %v1716
      %v2305 = vmul.f32 %v1963, %v1717
      %v2306 = vmul.f32 %v1963, %v1718
      %v2307 = vmul.f32 %v1968, %v1719
      %v2308 = vmul.f32 %v1968, %v1720
      %v2309 = vmul.f32 %v1973, %v1721
      %v2310 = vmul.f32 %v1973, %v1722
      %v2311 = vmul.f32 %v1978, %v1723
      %v2312 = vmul.f32 %v1978, %v1724
      %v2313 = vmul.f32 %v1983, %v1725
      %v2314 = vmul.f32 %v1983, %v1726
      %v2315 = vmul.f32 %v1988, %v1727
      %v2316 = vmul.f32 %v1988, %v1728
      %v2317 = vmul.f32 %v1993, %v1729
      %v2318 = vmul.f32 %v1993, %v1730
      %v2319 = vmul.f32 %v1998, %v1731
      %v2320 = vmul.f32 %v1998, %v1732
      %v2321 = vmul.f32 %v2003, %v1733
      %v2322 = vmul.f32 %v2003, %v1734
      %v2323 = vmul.f32 %v2008, %v1735
      %v2324 = vmul.f32 %v2008, %v1736
      %v2325 = vmul.f32 %v2013, %v1737
      %v2326 = vmul.f32 %v2013, %v1738
      %v2327 = vmul.f32 %v2018, %v1739
      %v2328 = vmul.f32 %v2018, %v1740
      %v2329 = vmul.f32 %v2023, %v1741
      %v2330 = vmul.f32 %v2023, %v1742
      %v2331 = vmul.f32 %v2028, %v1743
      %v2332 = vmul.f32 %v2028, %v1744
      %v2333 = vmul.f32 %v2033, %v1745
      %v2334 = vmul.f32 %v2033, %v1746
      %v2335 = vmul.f32 %v2038, %v1747
      %v2336 = vmul.f32 %v2038, %v1748
      %v2337 = vmul.f32 %v2043, %v1749
      %v2338 = vmul.f32 %v2043, %v1750
      %v2339 = vmul.f32 %v2048, %v1751
      %v2340 = vmul.f32 %v2048, %v1752
      %v2341 = vmul.f32 %v2053, %v1753
      %v2342 = vmul.f32 %v2053, %v1754
      %v2343 = vmul.f32 %v2058, %v1755
      %v2344 = vmul.f32 %v2058, %v1756
      %v2345 = vmul.f32 %v2063, %v1757
      %v2346 = vmul.f32 %v2063, %v1758
      %v2347 = vmul.f32 %v2068, %v1759
      %v2348 = vmul.f32 %v2068, %v1760
      %v2349 = vmul.f32 %v2073, %v1761
      %v2350 = vmul.f32 %v2073, %v1762
      %v2351 = vmul.f32 %v2078, %v1763
      %v2352 = vmul.f32 %v2078, %v1764
      %v2353 = vmul.f32 %v2083, %v1765
      %v2354 = vmul.f32 %v2083, %v1766
      %v2355 = vmul.f32 %v2088, %v1767
      %v2356 = vmul.f32 %v2088, %v1768
      %v2357 = vmul.f32 %v2093, %v1769
      %v2358 = vmul.f32 %v2093, %v1770
      %v2359 = vmul.f32 %v2098, %v1771
      %v2360 = vmul.f32 %v2098, %v1772
      %v2361 = vmul.f32 %v2103, %v1773
      %v2362 = vmul.f32 %v2103, %v1774
      %v2363 = vmul.f32 %v2108, %v1775
      %v2364 = vmul.f32 %v2108, %v1776
      %v2365 = vmul.f32 %v2113, %v1777
      %v2366 = vmul.f32 %v2113, %v1778
      %v2367 = vmul.f32 %v2118, %v1779
      %v2368 = vmul.f32 %v2118, %v1780
      %v2369 = vmul.f32 %v2123, %v1781
      %v2370 = vmul.f32 %v2123, %v1782
      %v2371 = vmul.f32 %v2128, %v1783
      %v2372 = vmul.f32 %v2128, %v1784
      %v2373 = vmul.f32 %v2133, %v1785
      %v2374 = vmul.f32 %v2133, %v1786
      %v2375 = vmul.f32 %v2138, %v1787
      %v2376 = vmul.f32 %v2138, %v1788
      %v2377 = vmul.f32 %v2143, %v1789
      %v2378 = vmul.f32 %v2143, %v1790
      %v2379 = vmul.f32 %v2148, %v1791
      %v2380 = vmul.f32 %v2148, %v1792
      %v2381 = vmul.f32 %v2153, %v1793
      %v2382 = vmul.f32 %v2153, %v1794
      %v2383 = vmul.f32 %v2158, %v1795
      %v2384 = vmul.f32 %v2158, %v1796
      %v2385 = vmul.f32 %v2163, %v1797
      %v2386 = vmul.f32 %v2163, %v1798
      %v2387 = vmul.f32 %v2168, %v1799
      %v2388 = vmul.f32 %v2168, %v1800
      %v2389 = vmul.f32 %v2173, %v1801
      %v2390 = vmul.f32 %v2173, %v1802
      %v2391 = vmul.f32 %v2178, %v1803
      %v2392 = vmul.f32 %v2178, %v1804
      %v2393 = vmul.f32 %v2183, %v1805
      %v2394 = vmul.f32 %v2183, %v1806
      %v2395 = vmul.f32 %v2188, %v1807
      %v2396 = vmul.f32 %v2188, %v1808
      %v2397 = vmul.f32 %v2193, %v1809
      %v2398 = vmul.f32 %v2193, %v1810
      %v2399 = vmul.f32 %v2198, %v1811
      %v2400 = vmul.f32 %v2198, %v1812
      %v2401 = vmul.f32 %v2203, %v1813
      %v2402 = vmul.f32 %v2203, %v1814
      %v2403 = vmul.f32 %v2208, %v1815
      %v2404 = vmul.f32 %v2208, %v1816
      %v2405 = vmul.f32 %v2213, %v1817
      %v2406 = vmul.f32 %v2213, %v1818
      %v2407 = vmul.f32 %v2218, %v1819
      %v2408 = vmul.f32 %v2218, %v1820
      %v2409 = vmul.f32 %v2223, %v1821
      %v2410 = vmul.f32 %v2223, %v1822
      %v2411 = vmul.f32 %v2228, %v1823
      %v2412 = vmul.f32 %v2228, %v1824
      %v2413 = vmul.f32 %v2233, %v1825
      %v2414 = vmul.f32 %v2233, %v1826
      %v2415 = vmul.f32 %v2238, %v1827
      %v2416 = vmul.f32 %v2238, %v1828
      %v2417 = vmul.f32 %v2243, %v1829
      %v2418 = vmul.f32 %v2243, %v1830
      %v2419 = vmul.f32 %v2248, %v1831
      %v2420 = vmul.f32 %v2248, %v1832
      %v2421 = vmul.f32 %v2253, %v1833
      %v2422 = vmul.f32 %v2253, %v1834
      %2423 = vst [vmem:[%s248] sm:$0xff] %v2255
      %vm2424 = vcmask 556032
      %2425 = vst.msk [vmem:[%s248 + $0x8] sm:$0xff] %vm2424, %v2256
      %2426 = vst [vmem:[%s248 + $0x10] sm:$0xff] %v2257
      %2427 = vst.msk [vmem:[%s248 + $0x18] sm:$0xff] %vm2424, %v2258
      %2428 = vst [vmem:[%s248 + $0x20] sm:$0xff] %v2259
      %2429 = vst.msk [vmem:[%s248 + $0x28] sm:$0xff] %vm2424, %v2260
      %2430 = vst [vmem:[%s248 + $0x30] sm:$0xff] %v2261
      %2431 = vst.msk [vmem:[%s248 + $0x38] sm:$0xff] %vm2424, %v2262
      %2432 = vst [vmem:[%s248 + $0x40] sm:$0xff] %v2263
      %2433 = vst.msk [vmem:[%s248 + $0x48] sm:$0xff] %vm2424, %v2264
      %2434 = vst [vmem:[%s248 + $0x50] sm:$0xff] %v2265
      %2435 = vst.msk [vmem:[%s248 + $0x58] sm:$0xff] %vm2424, %v2266
      %2436 = vst [vmem:[%s248 + $0x60] sm:$0xff] %v2267
      %2437 = vst.msk [vmem:[%s248 + $0x68] sm:$0xff] %vm2424, %v2268
      %2438 = vst [vmem:[%s248 + $0x70] sm:$0xff] %v2269
      %2439 = vst.msk [vmem:[%s248 + $0x78] sm:$0xff] %vm2424, %v2270
      %2440 = vst [vmem:[%s248 + $0x80] sm:$0xff] %v2271
      %2441 = vst.msk [vmem:[%s248 + $0x88] sm:$0xff] %vm2424, %v2272
      %2442 = vst [vmem:[%s248 + $0x90] sm:$0xff] %v2273
      %2443 = vst.msk [vmem:[%s248 + $0x98] sm:$0xff] %vm2424, %v2274
      %2444 = vst [vmem:[%s248 + $0xa0] sm:$0xff] %v2275
      %2445 = vst.msk [vmem:[%s248 + $0xa8] sm:$0xff] %vm2424, %v2276
      %2446 = vst [vmem:[%s248 + $0xb0] sm:$0xff] %v2277
      %2447 = vst.msk [vmem:[%s248 + $0xb8] sm:$0xff] %vm2424, %v2278
      %2448 = vst [vmem:[%s248 + $0xc0] sm:$0xff] %v2279
      %2449 = vst.msk [vmem:[%s248 + $0xc8] sm:$0xff] %vm2424, %v2280
      %2450 = vst [vmem:[%s248 + $0xd0] sm:$0xff] %v2281
      %2451 = vst.msk [vmem:[%s248 + $0xd8] sm:$0xff] %vm2424, %v2282
      %2452 = vst [vmem:[%s248 + $0xe0] sm:$0xff] %v2283
      %2453 = vst.msk [vmem:[%s248 + $0xe8] sm:$0xff] %vm2424, %v2284
      %2454 = vst [vmem:[%s248 + $0xf0] sm:$0xff] %v2285
      %2455 = vst.msk [vmem:[%s248 + $0xf8] sm:$0xff] %vm2424, %v2286
      %2456 = vst [vmem:[%s248 + $0x100] sm:$0xff] %v2287
      %2457 = vst.msk [vmem:[%s248 + $0x108] sm:$0xff] %vm2424, %v2288
      %2458 = vst [vmem:[%s248 + $0x110] sm:$0xff] %v2289
      %2459 = vst.msk [vmem:[%s248 + $0x118] sm:$0xff] %vm2424, %v2290
      %2460 = vst [vmem:[%s248 + $0x120] sm:$0xff] %v2291
      %2461 = vst.msk [vmem:[%s248 + $0x128] sm:$0xff] %vm2424, %v2292
      %2462 = vst [vmem:[%s248 + $0x130] sm:$0xff] %v2293
      %2463 = vst.msk [vmem:[%s248 + $0x138] sm:$0xff] %vm2424, %v2294
      %2464 = vst [vmem:[%s248 + $0x140] sm:$0xff] %v2295
      %2465 = vst.msk [vmem:[%s248 + $0x148] sm:$0xff] %vm2424, %v2296
      %2466 = vst [vmem:[%s248 + $0x150] sm:$0xff] %v2297
      %2467 = vst.msk [vmem:[%s248 + $0x158] sm:$0xff] %vm2424, %v2298
      %2468 = vst [vmem:[%s248 + $0x160] sm:$0xff] %v2299
      %2469 = vst.msk [vmem:[%s248 + $0x168] sm:$0xff] %vm2424, %v2300
      %2470 = vst [vmem:[%s248 + $0x170] sm:$0xff] %v2301
      %2471 = vst.msk [vmem:[%s248 + $0x178] sm:$0xff] %vm2424, %v2302
      %2472 = vst [vmem:[%s248 + $0x180] sm:$0xff] %v2303
      %2473 = vst.msk [vmem:[%s248 + $0x188] sm:$0xff] %vm2424, %v2304
      %2474 = vst [vmem:[%s248 + $0x190] sm:$0xff] %v2305
      %2475 = vst.msk [vmem:[%s248 + $0x198] sm:$0xff] %vm2424, %v2306
      %2476 = vst [vmem:[%s248 + $0x1a0] sm:$0xff] %v2307
      %2477 = vst.msk [vmem:[%s248 + $0x1a8] sm:$0xff] %vm2424, %v2308
      %2478 = vst [vmem:[%s248 + $0x1b0] sm:$0xff] %v2309
      %2479 = vst.msk [vmem:[%s248 + $0x1b8] sm:$0xff] %vm2424, %v2310
      %2480 = vst [vmem:[%s248 + $0x1c0] sm:$0xff] %v2311
      %2481 = vst.msk [vmem:[%s248 + $0x1c8] sm:$0xff] %vm2424, %v2312
      %2482 = vst [vmem:[%s248 + $0x1d0] sm:$0xff] %v2313
      %2483 = vst.msk [vmem:[%s248 + $0x1d8] sm:$0xff] %vm2424, %v2314
      %2484 = vst [vmem:[%s248 + $0x1e0] sm:$0xff] %v2315
      %2485 = vst.msk [vmem:[%s248 + $0x1e8] sm:$0xff] %vm2424, %v2316
      %2486 = vst [vmem:[%s248 + $0x1f0] sm:$0xff] %v2317
      %2487 = vst.msk [vmem:[%s248 + $0x1f8] sm:$0xff] %vm2424, %v2318
      %2488 = vst [vmem:[%s248 + $0x200] sm:$0xff] %v2319
      %2489 = vst.msk [vmem:[%s248 + $0x208] sm:$0xff] %vm2424, %v2320
      %2490 = vst [vmem:[%s248 + $0x210] sm:$0xff] %v2321
      %2491 = vst.msk [vmem:[%s248 + $0x218] sm:$0xff] %vm2424, %v2322
      %2492 = vst [vmem:[%s248 + $0x220] sm:$0xff] %v2323
      %2493 = vst.msk [vmem:[%s248 + $0x228] sm:$0xff] %vm2424, %v2324
      %2494 = vst [vmem:[%s248 + $0x230] sm:$0xff] %v2325
      %2495 = vst.msk [vmem:[%s248 + $0x238] sm:$0xff] %vm2424, %v2326
      %2496 = vst [vmem:[%s248 + $0x240] sm:$0xff] %v2327
      %2497 = vst.msk [vmem:[%s248 + $0x248] sm:$0xff] %vm2424, %v2328
      %2498 = vst [vmem:[%s248 + $0x250] sm:$0xff] %v2329
      %2499 = vst.msk [vmem:[%s248 + $0x258] sm:$0xff] %vm2424, %v2330
      %2500 = vst [vmem:[%s248 + $0x260] sm:$0xff] %v2331
      %2501 = vst.msk [vmem:[%s248 + $0x268] sm:$0xff] %vm2424, %v2332
      %2502 = vst [vmem:[%s248 + $0x270] sm:$0xff] %v2333
      %2503 = vst.msk [vmem:[%s248 + $0x278] sm:$0xff] %vm2424, %v2334
      %2504 = vst [vmem:[%s248 + $0x280] sm:$0xff] %v2335
      %2505 = vst.msk [vmem:[%s248 + $0x288] sm:$0xff] %vm2424, %v2336
      %2506 = vst [vmem:[%s248 + $0x290] sm:$0xff] %v2337
      %2507 = vst.msk [vmem:[%s248 + $0x298] sm:$0xff] %vm2424, %v2338
      %2508 = vst [vmem:[%s248 + $0x2a0] sm:$0xff] %v2339
      %2509 = vst.msk [vmem:[%s248 + $0x2a8] sm:$0xff] %vm2424, %v2340
      %2510 = vst [vmem:[%s248 + $0x2b0] sm:$0xff] %v2341
      %2511 = vst.msk [vmem:[%s248 + $0x2b8] sm:$0xff] %vm2424, %v2342
      %2512 = vst [vmem:[%s248 + $0x2c0] sm:$0xff] %v2343
      %2513 = vst.msk [vmem:[%s248 + $0x2c8] sm:$0xff] %vm2424, %v2344
      %2514 = vst [vmem:[%s248 + $0x2d0] sm:$0xff] %v2345
      %2515 = vst.msk [vmem:[%s248 + $0x2d8] sm:$0xff] %vm2424, %v2346
      %2516 = vst [vmem:[%s248 + $0x2e0] sm:$0xff] %v2347
      %2517 = vst.msk [vmem:[%s248 + $0x2e8] sm:$0xff] %vm2424, %v2348
      %2518 = vst [vmem:[%s248 + $0x2f0] sm:$0xff] %v2349
      %2519 = vst.msk [vmem:[%s248 + $0x2f8] sm:$0xff] %vm2424, %v2350
      %2520 = vst [vmem:[%s248 + $0x300] sm:$0xff] %v2351
      %2521 = vst.msk [vmem:[%s248 + $0x308] sm:$0xff] %vm2424, %v2352
      %2522 = vst [vmem:[%s248 + $0x310] sm:$0xff] %v2353
      %2523 = vst.msk [vmem:[%s248 + $0x318] sm:$0xff] %vm2424, %v2354
      %2524 = vst [vmem:[%s248 + $0x320] sm:$0xff] %v2355
      %2525 = vst.msk [vmem:[%s248 + $0x328] sm:$0xff] %vm2424, %v2356
      %2526 = vst [vmem:[%s248 + $0x330] sm:$0xff] %v2357
      %2527 = vst.msk [vmem:[%s248 + $0x338] sm:$0xff] %vm2424, %v2358
      %2528 = vst [vmem:[%s248 + $0x340] sm:$0xff] %v2359
      %2529 = vst.msk [vmem:[%s248 + $0x348] sm:$0xff] %vm2424, %v2360
      %2530 = vst [vmem:[%s248 + $0x350] sm:$0xff] %v2361
      %2531 = vst.msk [vmem:[%s248 + $0x358] sm:$0xff] %vm2424, %v2362
      %2532 = vst [vmem:[%s248 + $0x360] sm:$0xff] %v2363
      %2533 = vst.msk [vmem:[%s248 + $0x368] sm:$0xff] %vm2424, %v2364
      %2534 = vst [vmem:[%s248 + $0x370] sm:$0xff] %v2365
      %2535 = vst.msk [vmem:[%s248 + $0x378] sm:$0xff] %vm2424, %v2366
      %2536 = vst [vmem:[%s248 + $0x380] sm:$0xff] %v2367
      %2537 = vst.msk [vmem:[%s248 + $0x388] sm:$0xff] %vm2424, %v2368
      %2538 = vst [vmem:[%s248 + $0x390] sm:$0xff] %v2369
      %2539 = vst.msk [vmem:[%s248 + $0x398] sm:$0xff] %vm2424, %v2370
      %2540 = vst [vmem:[%s248 + $0x3a0] sm:$0xff] %v2371
      %2541 = vst.msk [vmem:[%s248 + $0x3a8] sm:$0xff] %vm2424, %v2372
      %2542 = vst [vmem:[%s248 + $0x3b0] sm:$0xff] %v2373
      %2543 = vst.msk [vmem:[%s248 + $0x3b8] sm:$0xff] %vm2424, %v2374
      %2544 = vst [vmem:[%s248 + $0x3c0] sm:$0xff] %v2375
      %2545 = vst.msk [vmem:[%s248 + $0x3c8] sm:$0xff] %vm2424, %v2376
      %2546 = vst [vmem:[%s248 + $0x3d0] sm:$0xff] %v2377
      %2547 = vst.msk [vmem:[%s248 + $0x3d8] sm:$0xff] %vm2424, %v2378
      %2548 = vst [vmem:[%s248 + $0x3e0] sm:$0xff] %v2379
      %2549 = vst.msk [vmem:[%s248 + $0x3e8] sm:$0xff] %vm2424, %v2380
      %2550 = vst [vmem:[%s248 + $0x3f0] sm:$0xff] %v2381
      %2551 = vst.msk [vmem:[%s248 + $0x3f8] sm:$0xff] %vm2424, %v2382
      %2552 = vst [vmem:[%s248 + $0x400] sm:$0xff] %v2383
      %2553 = vst.msk [vmem:[%s248 + $0x408] sm:$0xff] %vm2424, %v2384
      %2554 = vst [vmem:[%s248 + $0x410] sm:$0xff] %v2385
      %2555 = vst.msk [vmem:[%s248 + $0x418] sm:$0xff] %vm2424, %v2386
      %2556 = vst [vmem:[%s248 + $0x420] sm:$0xff] %v2387
      %2557 = vst.msk [vmem:[%s248 + $0x428] sm:$0xff] %vm2424, %v2388
      %2558 = vst [vmem:[%s248 + $0x430] sm:$0xff] %v2389
      %2559 = vst.msk [vmem:[%s248 + $0x438] sm:$0xff] %vm2424, %v2390
      %2560 = vst [vmem:[%s248 + $0x440] sm:$0xff] %v2391
      %2561 = vst.msk [vmem:[%s248 + $0x448] sm:$0xff] %vm2424, %v2392
      %2562 = vst [vmem:[%s248 + $0x450] sm:$0xff] %v2393
      %2563 = vst.msk [vmem:[%s248 + $0x458] sm:$0xff] %vm2424, %v2394
      %2564 = vst [vmem:[%s248 + $0x460] sm:$0xff] %v2395
      %2565 = vst.msk [vmem:[%s248 + $0x468] sm:$0xff] %vm2424, %v2396
      %2566 = vst [vmem:[%s248 + $0x470] sm:$0xff] %v2397
      %2567 = vst.msk [vmem:[%s248 + $0x478] sm:$0xff] %vm2424, %v2398
      %2568 = vst [vmem:[%s248 + $0x480] sm:$0xff] %v2399
      %2569 = vst.msk [vmem:[%s248 + $0x488] sm:$0xff] %vm2424, %v2400
      %2570 = vst [vmem:[%s248 + $0x490] sm:$0xff] %v2401
      %2571 = vst.msk [vmem:[%s248 + $0x498] sm:$0xff] %vm2424, %v2402
      %2572 = vst [vmem:[%s248 + $0x4a0] sm:$0xff] %v2403
      %2573 = vst.msk [vmem:[%s248 + $0x4a8] sm:$0xff] %vm2424, %v2404
      %2574 = vst [vmem:[%s248 + $0x4b0] sm:$0xff] %v2405
      %2575 = vst.msk [vmem:[%s248 + $0x4b8] sm:$0xff] %vm2424, %v2406
      %2576 = vst [vmem:[%s248 + $0x4c0] sm:$0xff] %v2407
      %2577 = vst.msk [vmem:[%s248 + $0x4c8] sm:$0xff] %vm2424, %v2408
      %2578 = vst [vmem:[%s248 + $0x4d0] sm:$0xff] %v2409
      %2579 = vst.msk [vmem:[%s248 + $0x4d8] sm:$0xff] %vm2424, %v2410
      %2580 = vst [vmem:[%s248 + $0x4e0] sm:$0xff] %v2411
      %2581 = vst.msk [vmem:[%s248 + $0x4e8] sm:$0xff] %vm2424, %v2412
      %2582 = vst [vmem:[%s248 + $0x4f0] sm:$0xff] %v2413
      %2583 = vst.msk [vmem:[%s248 + $0x4f8] sm:$0xff] %vm2424, %v2414
      %2584 = vst [vmem:[%s248 + $0x500] sm:$0xff] %v2415
      %2585 = vst.msk [vmem:[%s248 + $0x508] sm:$0xff] %vm2424, %v2416
      %2586 = vst [vmem:[%s248 + $0x510] sm:$0xff] %v2417
      %2587 = vst.msk [vmem:[%s248 + $0x518] sm:$0xff] %vm2424, %v2418
      %2588 = vst [vmem:[%s248 + $0x520] sm:$0xff] %v2419
      %2589 = vst.msk [vmem:[%s248 + $0x528] sm:$0xff] %vm2424, %v2420
      %2590 = vst [vmem:[%s248 + $0x530] sm:$0xff] %v2421
      %2591 = vst.msk [vmem:[%s248 + $0x538] sm:$0xff] %vm2424, %v2422
      %s2592 = smul.u32 84, %s15
      %p2593 = scmp.lt.s32.totalorder %s2592, 167
      %s2594 = scalar_select %p2593, %s2592, 167
      %s2595 = smul.addr %s2594, 2
      %s2596 = smul.addr %s2595, 8
      %s2597 = scalar_lea.vmem %s4, %s2596
      // Predicated region
      $region37: #{se_gate_mul.1} parent=35 // pred_check
        %p2598 = pneg %p132
      $region38: #{se_gate_mul.1} parent=35 // pred_check_branch
        %2600 = sbr.rel (%p2598) target = $region40
      $region39: #{se_gate_mul.1} parent=35 // pred_region
        %s2601 = smul.u32 84, %s15
      $region40: #{se_gate_mul.1} parent=35 // pred_fallthru
        _
    $region36: #{se_gate_mul.1} parent=5 // pred_fallthru
      _
    %p2602 = scmp.le.s32.totalorder 2, %s10
    // Predicated region
    $region41: #{se_gate_mul.1} parent=5 // pred_check
      %p2603 = pneg %p2602
    $region42: #{se_gate_mul.1} parent=5 // pred_check_branch
      %2605 = sbr.rel (%p2603) target = $region44
    $region43: #{se_gate_mul.1} parent=5 // pred_region
      %s2606 = ssub.s32 %s10, 2
      // Predicated region
      $region45: #{se_gate_mul.1} parent=43 // pred_check
        %p2607 = pneg %p138
      $region46: #{se_gate_mul.1} parent=43 // pred_check_branch
        %2609 = sbr.rel (%p2607) target = $region48
      $region47: #{se_gate_mul.1} parent=43 // pred_region
        %s2610 = smul.u32 84, %s16
        %p2611 = scmp.lt.s32.totalorder %s2610, 167
        %s2612 = scalar_select %p2611, %s2610, 167
        %s2613 = smul.addr %s2612, 2
        %s2614 = smul.addr %s2613, 8
        %s2615 = scalar_lea.vmem %s4, %s2614
      $region48: #{se_gate_mul.1} parent=43 // pred_fallthru
        _
    $region44: #{se_gate_mul.1} parent=5 // pred_fallthru
      _
  $region6: #{se_gate_mul.1} parent=0 // loop_footer
    %s14 = sadd.s32 1, %s10
  $region7: #{se_gate_mul.1} parent=0 // loop_footer_branch
    %9 = sbr.rel target = $region3
  $region8: #{se_gate_mul.1} parent=0 // loop_exit
    _

</llo_original>
